<compile_context>
chip_gen: v7x
topology: tpu7x:2x2x1
jax: 0.10.0
libtpu: 0.0.40
codegen_flags: <defaults>
</compile_context>

<pallas_src>
import jax
import jax.numpy as jnp
from jax import lax
from jax.experimental import pallas as pl
from jax.experimental.pallas import tpu as pltpu


# ----------------------------- Pallas kernel --------------------------------
def npi_kernel(
    # inputs (all fully resident in VMEM, single invocation)
    args_ref,      # [S*Bp, A]   flattened (time, padded-batch) args
    prog_ref,      # [S*Bp, P]   flattened program embeddings
    hidden_ref,    # [2, Bp, H]  (h0, c0)
    # f_enc
    w_enc_ref,     # [A, Ds]
    b_enc_ref,     # [1, Ds]
    # LSTM core (input weights split so no in-kernel concat is needed)
    w_ih_s_ref,    # [Ds, 4H]
    w_ih_p_ref,    # [P,  4H]
    w_hh_ref,      # [H,  4H]
    b_lstm_ref,    # [1,  4H]
    # merged heads:  [w_ret | w_key @ pkey_mem^T | w_args]
    w_head_ref,    # [H, C]   C = 1 + n_progs + A
    b_head_ref,    # [1, C]
    # outputs
    out_ref,       # [S*Bp, C]   packed [ret | log_probs | new_args]
    last_ref,      # [2, Bp, H]  final (h, c)
    # scratch
    h_all_sc,      # [S*Bp, H]   hidden state for every timestep
):
    SB, A = args_ref.shape
    Bp = hidden_ref.shape[1]
    S = SB // Bp
    H = w_hh_ref.shape[0]
    C = w_head_ref.shape[1]
    NP = C - 1 - A

    # ---- Phase 1: all non-recurrent input compute, batched over S*Bp ----
    a = args_ref[...]                               # [SB, A]
    p = prog_ref[...]                               # [SB, P]
    state = jnp.maximum(
        jnp.dot(a, w_enc_ref[...], preferred_element_type=jnp.float32)
        + b_enc_ref[...],
        0.0,
    )                                               # [SB, Ds]
    x_gates = (
        jnp.dot(state, w_ih_s_ref[...], preferred_element_type=jnp.float32)
        + jnp.dot(p, w_ih_p_ref[...], preferred_element_type=jnp.float32)
        + b_lstm_ref[...]
    )                                               # [SB, 4H]

    # ---- Phase 2: LSTM recurrence (only h @ w_hh stays serial) ----
    w_hh = w_hh_ref[...]                            # hoisted out of the loop
    h = hidden_ref[0]                               # [Bp, H]
    c = hidden_ref[1]                               # [Bp, H]
    for t in range(S):                              # statically unrolled (S=8)
        gates = x_gates[t * Bp:(t + 1) * Bp, :] + jnp.dot(
            h, w_hh, preferred_element_type=jnp.float32)      # [Bp, 4H]
        i_g = jax.nn.sigmoid(gates[:, 0 * H:1 * H])
        f_g = jax.nn.sigmoid(gates[:, 1 * H:2 * H])
        g_g = jnp.tanh(gates[:, 2 * H:3 * H])
        o_g = jax.nn.sigmoid(gates[:, 3 * H:4 * H])
        c = f_g * c + i_g * g_g
        h = o_g * jnp.tanh(c)
        h_all_sc[t * Bp:(t + 1) * Bp, :] = h

    # ---- Phase 3: all heads batched over the whole sequence ----
    h_all = h_all_sc[...]                           # [SB, H]
    head = (jnp.dot(h_all, w_head_ref[...], preferred_element_type=jnp.float32)
            + b_head_ref[...])                      # [SB, C]

    scores = head[:, 1:1 + NP]                      # [SB, NP]
    m = jnp.max(scores, axis=-1, keepdims=True)
    lse = m + jnp.log(jnp.sum(jnp.exp(scores - m), axis=-1, keepdims=True))

    # packed output, written once for the whole sequence
    out_ref[:, 0:1] = jax.nn.sigmoid(head[:, 0:1])  # ret
    out_ref[:, 1:1 + NP] = scores - lse             # prog_id log-probs
    out_ref[:, 1 + NP:C] = head[:, 1 + NP:C]        # new_args

    last_ref[0] = h
    last_ref[1] = c


# ------------------------------- wrapper -------------------------------------
def npi_forward(prog_id, args, hidden, params):
    """prog_id: [S, B] int32, args: [S, B, A], hidden: [2, B, H].

    Returns (ret [S,B], prog_id_log_probs [S,B,NP], new_args [S,B,A],
             last_hidden [2,B,H])."""
    S, B = prog_id.shape
    A = args.shape[-1]
    P = params["prog_mem"].shape[-1]
    H = params["w_hh"].shape[0]
    NP, K = params["pkey_mem"].shape
    C = 1 + NP + A

    # glue: program-memory embedding lookup (data-dependent gather)
    prog = params["prog_mem"][prog_id]              # [S, B, P]

    # pad batch to a full sublane group (multiple of 8)
    Bp = max(8, ((B + 7) // 8) * 8)
    pad = Bp - B
    if pad:
        args_p = jnp.pad(args, ((0, 0), (0, pad), (0, 0)))
        prog_p = jnp.pad(prog, ((0, 0), (0, pad), (0, 0)))
        hidden_p = jnp.pad(hidden, ((0, 0), (0, pad), (0, 0)))
    else:
        args_p, prog_p, hidden_p = args, prog, hidden

    args_flat = args_p.reshape(S * Bp, A)
    prog_flat = prog_p.reshape(S * Bp, P)

    # fold the key head into the program-key correlation (linear ops commute)
    w_score = params["w_key"] @ params["pkey_mem"].T          # [H, NP]
    b_score = params["b_key"] @ params["pkey_mem"].T          # [1, NP]
    # merge all heads into one matmul:  [ret | scores | new_args]
    w_head = jnp.concatenate([params["w_ret"], w_score, params["w_args"]],
                             axis=1)                          # [H, C]
    b_head = jnp.concatenate([params["b_ret"], b_score, params["b_args"]],
                             axis=1)                          # [1, C]

    out, last = pl.pallas_call(
        npi_kernel,
        out_shape=(
            jax.ShapeDtypeStruct((S * Bp, C), jnp.float32),
            jax.ShapeDtypeStruct((2, Bp, H), jnp.float32),
        ),
        scratch_shapes=[pltpu.VMEM((S * Bp, H), jnp.float32)],
    )(
        args_flat, prog_flat, hidden_p,
        params["w_enc"], params["b_enc"],
        params["w_ih_s"], params["w_ih_p"], params["w_hh"], params["b_lstm"],
        w_head, b_head,
    )

    out = out.reshape(S, Bp, C)[:, :B]              # drop batch padding
    ret = out[..., 0]
    logp = out[..., 1:1 + NP]
    new_args = out[..., 1 + NP:]
    last_hidden = last[:, :B]
    return ret, logp, new_args, last_hidden


# ------------------------ pure-JAX reference (check) --------------------------
def npi_forward_ref(prog_id, args, hidden, params):
    prog = params["prog_mem"][prog_id]
    state = jax.nn.relu(args @ params["w_enc"] + params["b_enc"])
    H = params["w_hh"].shape[0]

    def step(carry, xs):
        h, c = carry
        st, pg = xs
        gates = (st @ params["w_ih_s"] + pg @ params["w_ih_p"]
                 + h @ params["w_hh"] + params["b_lstm"])
        i_g = jax.nn.sigmoid(gates[:, 0 * H:1 * H])
        f_g = jax.nn.sigmoid(gates[:, 1 * H:2 * H])
        g_g = jnp.tanh(gates[:, 2 * H:3 * H])
        o_g = jax.nn.sigmoid(gates[:, 3 * H:4 * H])
        c_new = f_g * c + i_g * g_g
        h_new = o_g * jnp.tanh(c_new)
        ret = jax.nn.sigmoid(h_new @ params["w_ret"] + params["b_ret"])[:, 0]
        pkey = h_new @ params["w_key"] + params["b_key"]
        na = h_new @ params["w_args"] + params["b_args"]
        scores = pkey @ params["pkey_mem"].T
        logp = jax.nn.log_softmax(scores, axis=-1)
        return (h_new, c_new), (ret, logp, na)

    (h, c), (ret, logp, na) = lax.scan(step, (hidden[0], hidden[1]),
                                       (state, prog))
    return ret, logp, na, jnp.stack([h, c])


# --------------------------------- main ---------------------------------------
if __name__ == "__main__":
    S, B = 8, 4            # seq_len, batch
    A = 8                  # args_dim
    P = 16                 # prog_dim
    Ds = 16                # state_dim (f_enc output)
    H = 32                 # core LSTM hidden
    K = 16                 # program-key dim
    NPROG = 8              # n_progs

    key = jax.random.PRNGKey(0)
    ks = jax.random.split(key, 20)
    sc = 0.1
    params = {
        "prog_mem": jax.random.normal(ks[0], (NPROG, P), jnp.float32),
        "pkey_mem": jax.random.normal(ks[1], (NPROG, K), jnp.float32) * sc,
        "w_enc":   jax.random.normal(ks[2], (A, Ds), jnp.float32) * sc,
        "b_enc":   jax.random.normal(ks[3], (1, Ds), jnp.float32) * sc,
        "w_ih_s":  jax.random.normal(ks[4], (Ds, 4 * H), jnp.float32) * sc,
        "w_ih_p":  jax.random.normal(ks[5], (P, 4 * H), jnp.float32) * sc,
        "w_hh":    jax.random.normal(ks[6], (H, 4 * H), jnp.float32) * sc,
        "b_lstm":  jax.random.normal(ks[7], (1, 4 * H), jnp.float32) * sc,
        "w_ret":   jax.random.normal(ks[8], (H, 1), jnp.float32) * sc,
        "b_ret":   jax.random.normal(ks[9], (1, 1), jnp.float32) * sc,
        "w_key":   jax.random.normal(ks[10], (H, K), jnp.float32) * sc,
        "b_key":   jax.random.normal(ks[11], (1, K), jnp.float32) * sc,
        "w_args":  jax.random.normal(ks[12], (H, A), jnp.float32) * sc,
        "b_args":  jax.random.normal(ks[13], (1, A), jnp.float32) * sc,
    }

    prog_id = jax.random.randint(ks[14], (S, B), 0, NPROG, jnp.int32)
    args = jax.random.normal(ks[15], (S, B, A), jnp.float32)
    hidden = jax.random.normal(ks[16], (2, B, H), jnp.float32) * sc

    outs = jax.block_until_ready(npi_forward(prog_id, args, hidden, params))
    refs = jax.block_until_ready(npi_forward_ref(prog_id, args, hidden, params))

    for o, r in zip(outs, refs):
        assert o.shape == r.shape, (o.shape, r.shape)
        assert jnp.allclose(o, r, atol=1e-4, rtol=1e-4), float(
            jnp.max(jnp.abs(o - r)))

    # TODO(synk): NPI.run() (stack-based interpreter loop with data-dependent
    # control flow / environment side effects) has no clean Pallas equivalent.
    print("KERNEL_OK")
</pallas_src>

<mosaic_0001>
module attributes {stable_mosaic.version = 11 : i64} {
  func.func @npi_kernel(%arg0: memref<64x8xf32, #tpu.memory_space<vmem>>, %arg1: memref<64x16xf32, #tpu.memory_space<vmem>>, %arg2: memref<2x8x32xf32, #tpu.memory_space<vmem>>, %arg3: memref<8x16xf32, #tpu.memory_space<vmem>>, %arg4: memref<1x16xf32, #tpu.memory_space<vmem>>, %arg5: memref<16x128xf32, #tpu.memory_space<vmem>>, %arg6: memref<16x128xf32, #tpu.memory_space<vmem>>, %arg7: memref<32x128xf32, #tpu.memory_space<vmem>>, %arg8: memref<1x128xf32, #tpu.memory_space<vmem>>, %arg9: memref<32x17xf32, #tpu.memory_space<vmem>>, %arg10: memref<1x17xf32, #tpu.memory_space<vmem>>, %arg11: memref<64x17xf32, #tpu.memory_space<vmem>>, %arg12: memref<2x8x32xf32, #tpu.memory_space<vmem>>, %arg13: memref<64x32xf32, #tpu.memory_space<vmem>>) attributes {dimension_semantics = [], scalar_prefetch = 0 : i64, scratch_operands = 1 : i64, tpu.core_type = #tpu.core_type<tc>} {
    %c0 = arith.constant 0 : index
    %c0_0 = arith.constant 0 : index
    %0 = vector.load %arg0[%c0, %c0_0] : memref<64x8xf32, #tpu.memory_space<vmem>>, vector<64x8xf32>
    %c0_1 = arith.constant 0 : index
    %c0_2 = arith.constant 0 : index
    %1 = vector.load %arg1[%c0_1, %c0_2] : memref<64x16xf32, #tpu.memory_space<vmem>>, vector<64x16xf32>
    %c0_3 = arith.constant 0 : index
    %c0_4 = arith.constant 0 : index
    %2 = vector.load %arg3[%c0_3, %c0_4] : memref<8x16xf32, #tpu.memory_space<vmem>>, vector<8x16xf32>
    %cst = arith.constant dense<0.000000e+00> : vector<64x16xf32>
    %3 = tpu.matmul %0, %2, %cst {dimension_numbers = #tpu.dot_dimension_numbers<[1], [0], [0], [1], [0, 0, 1, 1], [], []>} : vector<64x8xf32>, vector<8x16xf32>, vector<64x16xf32> -> vector<64x16xf32>
    %c0_5 = arith.constant 0 : index
    %c0_6 = arith.constant 0 : index
    %4 = vector.load %arg4[%c0_5, %c0_6] : memref<1x16xf32, #tpu.memory_space<vmem>>, vector<1x16xf32>
    %5 = vector.broadcast %4 : vector<1x16xf32> to vector<64x16xf32>
    %6 = arith.addf %3, %5 : vector<64x16xf32>
    %cst_7 = arith.constant 0.000000e+00 : f32
    %7 = vector.broadcast %cst_7 : f32 to vector<64x16xf32>
    %8 = arith.maximumf %6, %7 : vector<64x16xf32>
    %c0_8 = arith.constant 0 : index
    %c0_9 = arith.constant 0 : index
    %9 = vector.load %arg5[%c0_8, %c0_9] : memref<16x128xf32, #tpu.memory_space<vmem>>, vector<16x128xf32>
    %cst_10 = arith.constant dense<0.000000e+00> : vector<64x128xf32>
    %10 = tpu.matmul %8, %9, %cst_10 {dimension_numbers = #tpu.dot_dimension_numbers<[1], [0], [0], [1], [0, 0, 1, 1], [], []>} : vector<64x16xf32>, vector<16x128xf32>, vector<64x128xf32> -> vector<64x128xf32>
    %c0_11 = arith.constant 0 : index
    %c0_12 = arith.constant 0 : index
    %11 = vector.load %arg6[%c0_11, %c0_12] : memref<16x128xf32, #tpu.memory_space<vmem>>, vector<16x128xf32>
    %cst_13 = arith.constant dense<0.000000e+00> : vector<64x128xf32>
    %12 = tpu.matmul %1, %11, %cst_13 {dimension_numbers = #tpu.dot_dimension_numbers<[1], [0], [0], [1], [0, 0, 1, 1], [], []>} : vector<64x16xf32>, vector<16x128xf32>, vector<64x128xf32> -> vector<64x128xf32>
    %13 = arith.addf %10, %12 : vector<64x128xf32>
    %c0_14 = arith.constant 0 : index
    %c0_15 = arith.constant 0 : index
    %14 = vector.load %arg8[%c0_14, %c0_15] : memref<1x128xf32, #tpu.memory_space<vmem>>, vector<1x128xf32>
    %15 = vector.broadcast %14 : vector<1x128xf32> to vector<64x128xf32>
    %16 = arith.addf %13, %15 : vector<64x128xf32>
    %c0_16 = arith.constant 0 : index
    %c0_17 = arith.constant 0 : index
    %17 = vector.load %arg7[%c0_16, %c0_17] : memref<32x128xf32, #tpu.memory_space<vmem>>, vector<32x128xf32>
    %c0_18 = arith.constant 0 : index
    %c0_19 = arith.constant 0 : index
    %c0_20 = arith.constant 0 : index
    %18 = vector.load %arg2[%c0_18, %c0_19, %c0_20] : memref<2x8x32xf32, #tpu.memory_space<vmem>>, vector<1x8x32xf32>
    %19 = vector.shape_cast %18 : vector<1x8x32xf32> to vector<8x32xf32>
    %c1 = arith.constant 1 : index
    %c0_21 = arith.constant 0 : index
    %c0_22 = arith.constant 0 : index
    %20 = vector.load %arg2[%c1, %c0_21, %c0_22] : memref<2x8x32xf32, #tpu.memory_space<vmem>>, vector<1x8x32xf32>
    %21 = vector.shape_cast %20 : vector<1x8x32xf32> to vector<8x32xf32>
    %22 = vector.extract_strided_slice %16 {offsets = [0, 0], sizes = [8, 128], strides = [1, 1]} : vector<64x128xf32> to vector<8x128xf32>
    %cst_23 = arith.constant dense<0.000000e+00> : vector<8x128xf32>
    %23 = tpu.matmul %19, %17, %cst_23 {dimension_numbers = #tpu.dot_dimension_numbers<[1], [0], [0], [1], [0, 0, 1, 1], [], []>} : vector<8x32xf32>, vector<32x128xf32>, vector<8x128xf32> -> vector<8x128xf32>
    %24 = arith.addf %22, %23 : vector<8x128xf32>
    %25 = vector.extract_strided_slice %24 {offsets = [0, 0], sizes = [8, 32], strides = [1, 1]} : vector<8x128xf32> to vector<8x32xf32>
    %26 = arith.negf %25 : vector<8x32xf32>
    %27 = math.exp %26 : vector<8x32xf32>
    %cst_24 = arith.constant 1.000000e+00 : f32
    %28 = vector.broadcast %cst_24 : f32 to vector<8x32xf32>
    %29 = arith.addf %28, %27 : vector<8x32xf32>
    %30 = arith.divf %28, %29 : vector<8x32xf32>
    %31 = vector.extract_strided_slice %24 {offsets = [0, 32], sizes = [8, 32], strides = [1, 1]} : vector<8x128xf32> to vector<8x32xf32>
    %32 = arith.negf %31 : vector<8x32xf32>
    %33 = math.exp %32 : vector<8x32xf32>
    %cst_25 = arith.constant 1.000000e+00 : f32
    %34 = vector.broadcast %cst_25 : f32 to vector<8x32xf32>
    %35 = arith.addf %34, %33 : vector<8x32xf32>
    %36 = arith.divf %34, %35 : vector<8x32xf32>
    %37 = vector.extract_strided_slice %24 {offsets = [0, 64], sizes = [8, 32], strides = [1, 1]} : vector<8x128xf32> to vector<8x32xf32>
    %38 = math.tanh %37 : vector<8x32xf32>
    %39 = vector.extract_strided_slice %24 {offsets = [0, 96], sizes = [8, 32], strides = [1, 1]} : vector<8x128xf32> to vector<8x32xf32>
    %40 = arith.negf %39 : vector<8x32xf32>
    %41 = math.exp %40 : vector<8x32xf32>
    %cst_26 = arith.constant 1.000000e+00 : f32
    %42 = vector.broadcast %cst_26 : f32 to vector<8x32xf32>
    %43 = arith.addf %42, %41 : vector<8x32xf32>
    %44 = arith.divf %42, %43 : vector<8x32xf32>
    %45 = arith.mulf %36, %21 : vector<8x32xf32>
    %46 = arith.mulf %30, %38 : vector<8x32xf32>
    %47 = arith.addf %45, %46 : vector<8x32xf32>
    %48 = math.tanh %47 : vector<8x32xf32>
    %49 = arith.mulf %44, %48 : vector<8x32xf32>
    %c0_27 = arith.constant 0 : index
    %c0_28 = arith.constant 0 : index
    %50 = vector.load %arg13[%c0_27, %c0_28] : memref<64x32xf32, #tpu.memory_space<vmem>>, vector<8x32xf32>
    tpu.vector_store %arg13[%c0_27, %c0_28], %49 {strides = array<i32>} : memref<64x32xf32, #tpu.memory_space<vmem>>, vector<8x32xf32>,
    %51 = vector.extract_strided_slice %16 {offsets = [8, 0], sizes = [8, 128], strides = [1, 1]} : vector<64x128xf32> to vector<8x128xf32>
    %cst_29 = arith.constant dense<0.000000e+00> : vector<8x128xf32>
    %52 = tpu.matmul %49, %17, %cst_29 {dimension_numbers = #tpu.dot_dimension_numbers<[1], [0], [0], [1], [0, 0, 1, 1], [], []>} : vector<8x32xf32>, vector<32x128xf32>, vector<8x128xf32> -> vector<8x128xf32>
    %53 = arith.addf %51, %52 : vector<8x128xf32>
    %54 = vector.extract_strided_slice %53 {offsets = [0, 0], sizes = [8, 32], strides = [1, 1]} : vector<8x128xf32> to vector<8x32xf32>
    %55 = arith.negf %54 : vector<8x32xf32>
    %56 = math.exp %55 : vector<8x32xf32>
    %cst_30 = arith.constant 1.000000e+00 : f32
    %57 = vector.broadcast %cst_30 : f32 to vector<8x32xf32>
    %58 = arith.addf %57, %56 : vector<8x32xf32>
    %59 = arith.divf %57, %58 : vector<8x32xf32>
    %60 = vector.extract_strided_slice %53 {offsets = [0, 32], sizes = [8, 32], strides = [1, 1]} : vector<8x128xf32> to vector<8x32xf32>
    %61 = arith.negf %60 : vector<8x32xf32>
    %62 = math.exp %61 : vector<8x32xf32>
    %cst_31 = arith.constant 1.000000e+00 : f32
    %63 = vector.broadcast %cst_31 : f32 to vector<8x32xf32>
    %64 = arith.addf %63, %62 : vector<8x32xf32>
    %65 = arith.divf %63, %64 : vector<8x32xf32>
    %66 = vector.extract_strided_slice %53 {offsets = [0, 64], sizes = [8, 32], strides = [1, 1]} : vector<8x128xf32> to vector<8x32xf32>
    %67 = math.tanh %66 : vector<8x32xf32>
    %68 = vector.extract_strided_slice %53 {offsets = [0, 96], sizes = [8, 32], strides = [1, 1]} : vector<8x128xf32> to vector<8x32xf32>
    %69 = arith.negf %68 : vector<8x32xf32>
    %70 = math.exp %69 : vector<8x32xf32>
    %cst_32 = arith.constant 1.000000e+00 : f32
    %71 = vector.broadcast %cst_32 : f32 to vector<8x32xf32>
    %72 = arith.addf %71, %70 : vector<8x32xf32>
    %73 = arith.divf %71, %72 : vector<8x32xf32>
    %74 = arith.mulf %65, %47 : vector<8x32xf32>
    %75 = arith.mulf %59, %67 : vector<8x32xf32>
    %76 = arith.addf %74, %75 : vector<8x32xf32>
    %77 = math.tanh %76 : vector<8x32xf32>
    %78 = arith.mulf %73, %77 : vector<8x32xf32>
    %c8 = arith.constant 8 : index
    %c0_33 = arith.constant 0 : index
    %79 = vector.load %arg13[%c8, %c0_33] : memref<64x32xf32, #tpu.memory_space<vmem>>, vector<8x32xf32>
    tpu.vector_store %arg13[%c8, %c0_33], %78 {strides = array<i32>} : memref<64x32xf32, #tpu.memory_space<vmem>>, vector<8x32xf32>,
    %80 = vector.extract_strided_slice %16 {offsets = [16, 0], sizes = [8, 128], strides = [1, 1]} : vector<64x128xf32> to vector<8x128xf32>
    %cst_34 = arith.constant dense<0.000000e+00> : vector<8x128xf32>
    %81 = tpu.matmul %78, %17, %cst_34 {dimension_numbers = #tpu.dot_dimension_numbers<[1], [0], [0], [1], [0, 0, 1, 1], [], []>} : vector<8x32xf32>, vector<32x128xf32>, vector<8x128xf32> -> vector<8x128xf32>
    %82 = arith.addf %80, %81 : vector<8x128xf32>
    %83 = vector.extract_strided_slice %82 {offsets = [0, 0], sizes = [8, 32], strides = [1, 1]} : vector<8x128xf32> to vector<8x32xf32>
    %84 = arith.negf %83 : vector<8x32xf32>
    %85 = math.exp %84 : vector<8x32xf32>
    %cst_35 = arith.constant 1.000000e+00 : f32
    %86 = vector.broadcast %cst_35 : f32 to vector<8x32xf32>
    %87 = arith.addf %86, %85 : vector<8x32xf32>
    %88 = arith.divf %86, %87 : vector<8x32xf32>
    %89 = vector.extract_strided_slice %82 {offsets = [0, 32], sizes = [8, 32], strides = [1, 1]} : vector<8x128xf32> to vector<8x32xf32>
    %90 = arith.negf %89 : vector<8x32xf32>
    %91 = math.exp %90 : vector<8x32xf32>
    %cst_36 = arith.constant 1.000000e+00 : f32
    %92 = vector.broadcast %cst_36 : f32 to vector<8x32xf32>
    %93 = arith.addf %92, %91 : vector<8x32xf32>
    %94 = arith.divf %92, %93 : vector<8x32xf32>
    %95 = vector.extract_strided_slice %82 {offsets = [0, 64], sizes = [8, 32], strides = [1, 1]} : vector<8x128xf32> to vector<8x32xf32>
    %96 = math.tanh %95 : vector<8x32xf32>
    %97 = vector.extract_strided_slice %82 {offsets = [0, 96], sizes = [8, 32], strides = [1, 1]} : vector<8x128xf32> to vector<8x32xf32>
    %98 = arith.negf %97 : vector<8x32xf32>
    %99 = math.exp %98 : vector<8x32xf32>
    %cst_37 = arith.constant 1.000000e+00 : f32
    %100 = vector.broadcast %cst_37 : f32 to vector<8x32xf32>
    %101 = arith.addf %100, %99 : vector<8x32xf32>
    %102 = arith.divf %100, %101 : vector<8x32xf32>
    %103 = arith.mulf %94, %76 : vector<8x32xf32>
    %104 = arith.mulf %88, %96 : vector<8x32xf32>
    %105 = arith.addf %103, %104 : vector<8x32xf32>
    %106 = math.tanh %105 : vector<8x32xf32>
    %107 = arith.mulf %102, %106 : vector<8x32xf32>
    %c16 = arith.constant 16 : index
    %c0_38 = arith.constant 0 : index
    %108 = vector.load %arg13[%c16, %c0_38] : memref<64x32xf32, #tpu.memory_space<vmem>>, vector<8x32xf32>
    tpu.vector_store %arg13[%c16, %c0_38], %107 {strides = array<i32>} : memref<64x32xf32, #tpu.memory_space<vmem>>, vector<8x32xf32>,
    %109 = vector.extract_strided_slice %16 {offsets = [24, 0], sizes = [8, 128], strides = [1, 1]} : vector<64x128xf32> to vector<8x128xf32>
    %cst_39 = arith.constant dense<0.000000e+00> : vector<8x128xf32>
    %110 = tpu.matmul %107, %17, %cst_39 {dimension_numbers = #tpu.dot_dimension_numbers<[1], [0], [0], [1], [0, 0, 1, 1], [], []>} : vector<8x32xf32>, vector<32x128xf32>, vector<8x128xf32> -> vector<8x128xf32>
    %111 = arith.addf %109, %110 : vector<8x128xf32>
    %112 = vector.extract_strided_slice %111 {offsets = [0, 0], sizes = [8, 32], strides = [1, 1]} : vector<8x128xf32> to vector<8x32xf32>
    %113 = arith.negf %112 : vector<8x32xf32>
    %114 = math.exp %113 : vector<8x32xf32>
    %cst_40 = arith.constant 1.000000e+00 : f32
    %115 = vector.broadcast %cst_40 : f32 to vector<8x32xf32>
    %116 = arith.addf %115, %114 : vector<8x32xf32>
    %117 = arith.divf %115, %116 : vector<8x32xf32>
    %118 = vector.extract_strided_slice %111 {offsets = [0, 32], sizes = [8, 32], strides = [1, 1]} : vector<8x128xf32> to vector<8x32xf32>
    %119 = arith.negf %118 : vector<8x32xf32>
    %120 = math.exp %119 : vector<8x32xf32>
    %cst_41 = arith.constant 1.000000e+00 : f32
    %121 = vector.broadcast %cst_41 : f32 to vector<8x32xf32>
    %122 = arith.addf %121, %120 : vector<8x32xf32>
    %123 = arith.divf %121, %122 : vector<8x32xf32>
    %124 = vector.extract_strided_slice %111 {offsets = [0, 64], sizes = [8, 32], strides = [1, 1]} : vector<8x128xf32> to vector<8x32xf32>
    %125 = math.tanh %124 : vector<8x32xf32>
    %126 = vector.extract_strided_slice %111 {offsets = [0, 96], sizes = [8, 32], strides = [1, 1]} : vector<8x128xf32> to vector<8x32xf32>
    %127 = arith.negf %126 : vector<8x32xf32>
    %128 = math.exp %127 : vector<8x32xf32>
    %cst_42 = arith.constant 1.000000e+00 : f32
    %129 = vector.broadcast %cst_42 : f32 to vector<8x32xf32>
    %130 = arith.addf %129, %128 : vector<8x32xf32>
    %131 = arith.divf %129, %130 : vector<8x32xf32>
    %132 = arith.mulf %123, %105 : vector<8x32xf32>
    %133 = arith.mulf %117, %125 : vector<8x32xf32>
    %134 = arith.addf %132, %133 : vector<8x32xf32>
    %135 = math.tanh %134 : vector<8x32xf32>
    %136 = arith.mulf %131, %135 : vector<8x32xf32>
    %c24 = arith.constant 24 : index
    %c0_43 = arith.constant 0 : index
    %137 = vector.load %arg13[%c24, %c0_43] : memref<64x32xf32, #tpu.memory_space<vmem>>, vector<8x32xf32>
    tpu.vector_store %arg13[%c24, %c0_43], %136 {strides = array<i32>} : memref<64x32xf32, #tpu.memory_space<vmem>>, vector<8x32xf32>,
    %138 = vector.extract_strided_slice %16 {offsets = [32, 0], sizes = [8, 128], strides = [1, 1]} : vector<64x128xf32> to vector<8x128xf32>
    %cst_44 = arith.constant dense<0.000000e+00> : vector<8x128xf32>
    %139 = tpu.matmul %136, %17, %cst_44 {dimension_numbers = #tpu.dot_dimension_numbers<[1], [0], [0], [1], [0, 0, 1, 1], [], []>} : vector<8x32xf32>, vector<32x128xf32>, vector<8x128xf32> -> vector<8x128xf32>
    %140 = arith.addf %138, %139 : vector<8x128xf32>
    %141 = vector.extract_strided_slice %140 {offsets = [0, 0], sizes = [8, 32], strides = [1, 1]} : vector<8x128xf32> to vector<8x32xf32>
    %142 = arith.negf %141 : vector<8x32xf32>
    %143 = math.exp %142 : vector<8x32xf32>
    %cst_45 = arith.constant 1.000000e+00 : f32
    %144 = vector.broadcast %cst_45 : f32 to vector<8x32xf32>
    %145 = arith.addf %144, %143 : vector<8x32xf32>
    %146 = arith.divf %144, %145 : vector<8x32xf32>
    %147 = vector.extract_strided_slice %140 {offsets = [0, 32], sizes = [8, 32], strides = [1, 1]} : vector<8x128xf32> to vector<8x32xf32>
    %148 = arith.negf %147 : vector<8x32xf32>
    %149 = math.exp %148 : vector<8x32xf32>
    %cst_46 = arith.constant 1.000000e+00 : f32
    %150 = vector.broadcast %cst_46 : f32 to vector<8x32xf32>
    %151 = arith.addf %150, %149 : vector<8x32xf32>
    %152 = arith.divf %150, %151 : vector<8x32xf32>
    %153 = vector.extract_strided_slice %140 {offsets = [0, 64], sizes = [8, 32], strides = [1, 1]} : vector<8x128xf32> to vector<8x32xf32>
    %154 = math.tanh %153 : vector<8x32xf32>
    %155 = vector.extract_strided_slice %140 {offsets = [0, 96], sizes = [8, 32], strides = [1, 1]} : vector<8x128xf32> to vector<8x32xf32>
    %156 = arith.negf %155 : vector<8x32xf32>
    %157 = math.exp %156 : vector<8x32xf32>
    %cst_47 = arith.constant 1.000000e+00 : f32
    %158 = vector.broadcast %cst_47 : f32 to vector<8x32xf32>
    %159 = arith.addf %158, %157 : vector<8x32xf32>
    %160 = arith.divf %158, %159 : vector<8x32xf32>
    %161 = arith.mulf %152, %134 : vector<8x32xf32>
    %162 = arith.mulf %146, %154 : vector<8x32xf32>
    %163 = arith.addf %161, %162 : vector<8x32xf32>
    %164 = math.tanh %163 : vector<8x32xf32>
    %165 = arith.mulf %160, %164 : vector<8x32xf32>
    %c32 = arith.constant 32 : index
    %c0_48 = arith.constant 0 : index
    %166 = vector.load %arg13[%c32, %c0_48] : memref<64x32xf32, #tpu.memory_space<vmem>>, vector<8x32xf32>
    tpu.vector_store %arg13[%c32, %c0_48], %165 {strides = array<i32>} : memref<64x32xf32, #tpu.memory_space<vmem>>, vector<8x32xf32>,
    %167 = vector.extract_strided_slice %16 {offsets = [40, 0], sizes = [8, 128], strides = [1, 1]} : vector<64x128xf32> to vector<8x128xf32>
    %cst_49 = arith.constant dense<0.000000e+00> : vector<8x128xf32>
    %168 = tpu.matmul %165, %17, %cst_49 {dimension_numbers = #tpu.dot_dimension_numbers<[1], [0], [0], [1], [0, 0, 1, 1], [], []>} : vector<8x32xf32>, vector<32x128xf32>, vector<8x128xf32> -> vector<8x128xf32>
    %169 = arith.addf %167, %168 : vector<8x128xf32>
    %170 = vector.extract_strided_slice %169 {offsets = [0, 0], sizes = [8, 32], strides = [1, 1]} : vector<8x128xf32> to vector<8x32xf32>
    %171 = arith.negf %170 : vector<8x32xf32>
    %172 = math.exp %171 : vector<8x32xf32>
    %cst_50 = arith.constant 1.000000e+00 : f32
    %173 = vector.broadcast %cst_50 : f32 to vector<8x32xf32>
    %174 = arith.addf %173, %172 : vector<8x32xf32>
    %175 = arith.divf %173, %174 : vector<8x32xf32>
    %176 = vector.extract_strided_slice %169 {offsets = [0, 32], sizes = [8, 32], strides = [1, 1]} : vector<8x128xf32> to vector<8x32xf32>
    %177 = arith.negf %176 : vector<8x32xf32>
    %178 = math.exp %177 : vector<8x32xf32>
    %cst_51 = arith.constant 1.000000e+00 : f32
    %179 = vector.broadcast %cst_51 : f32 to vector<8x32xf32>
    %180 = arith.addf %179, %178 : vector<8x32xf32>
    %181 = arith.divf %179, %180 : vector<8x32xf32>
    %182 = vector.extract_strided_slice %169 {offsets = [0, 64], sizes = [8, 32], strides = [1, 1]} : vector<8x128xf32> to vector<8x32xf32>
    %183 = math.tanh %182 : vector<8x32xf32>
    %184 = vector.extract_strided_slice %169 {offsets = [0, 96], sizes = [8, 32], strides = [1, 1]} : vector<8x128xf32> to vector<8x32xf32>
    %185 = arith.negf %184 : vector<8x32xf32>
    %186 = math.exp %185 : vector<8x32xf32>
    %cst_52 = arith.constant 1.000000e+00 : f32
    %187 = vector.broadcast %cst_52 : f32 to vector<8x32xf32>
    %188 = arith.addf %187, %186 : vector<8x32xf32>
    %189 = arith.divf %187, %188 : vector<8x32xf32>
    %190 = arith.mulf %181, %163 : vector<8x32xf32>
    %191 = arith.mulf %175, %183 : vector<8x32xf32>
    %192 = arith.addf %190, %191 : vector<8x32xf32>
    %193 = math.tanh %192 : vector<8x32xf32>
    %194 = arith.mulf %189, %193 : vector<8x32xf32>
    %c40 = arith.constant 40 : index
    %c0_53 = arith.constant 0 : index
    %195 = vector.load %arg13[%c40, %c0_53] : memref<64x32xf32, #tpu.memory_space<vmem>>, vector<8x32xf32>
    tpu.vector_store %arg13[%c40, %c0_53], %194 {strides = array<i32>} : memref<64x32xf32, #tpu.memory_space<vmem>>, vector<8x32xf32>,
    %196 = vector.extract_strided_slice %16 {offsets = [48, 0], sizes = [8, 128], strides = [1, 1]} : vector<64x128xf32> to vector<8x128xf32>
    %cst_54 = arith.constant dense<0.000000e+00> : vector<8x128xf32>
    %197 = tpu.matmul %194, %17, %cst_54 {dimension_numbers = #tpu.dot_dimension_numbers<[1], [0], [0], [1], [0, 0, 1, 1], [], []>} : vector<8x32xf32>, vector<32x128xf32>, vector<8x128xf32> -> vector<8x128xf32>
    %198 = arith.addf %196, %197 : vector<8x128xf32>
    %199 = vector.extract_strided_slice %198 {offsets = [0, 0], sizes = [8, 32], strides = [1, 1]} : vector<8x128xf32> to vector<8x32xf32>
    %200 = arith.negf %199 : vector<8x32xf32>
    %201 = math.exp %200 : vector<8x32xf32>
    %cst_55 = arith.constant 1.000000e+00 : f32
    %202 = vector.broadcast %cst_55 : f32 to vector<8x32xf32>
    %203 = arith.addf %202, %201 : vector<8x32xf32>
    %204 = arith.divf %202, %203 : vector<8x32xf32>
    %205 = vector.extract_strided_slice %198 {offsets = [0, 32], sizes = [8, 32], strides = [1, 1]} : vector<8x128xf32> to vector<8x32xf32>
    %206 = arith.negf %205 : vector<8x32xf32>
    %207 = math.exp %206 : vector<8x32xf32>
    %cst_56 = arith.constant 1.000000e+00 : f32
    %208 = vector.broadcast %cst_56 : f32 to vector<8x32xf32>
    %209 = arith.addf %208, %207 : vector<8x32xf32>
    %210 = arith.divf %208, %209 : vector<8x32xf32>
    %211 = vector.extract_strided_slice %198 {offsets = [0, 64], sizes = [8, 32], strides = [1, 1]} : vector<8x128xf32> to vector<8x32xf32>
    %212 = math.tanh %211 : vector<8x32xf32>
    %213 = vector.extract_strided_slice %198 {offsets = [0, 96], sizes = [8, 32], strides = [1, 1]} : vector<8x128xf32> to vector<8x32xf32>
    %214 = arith.negf %213 : vector<8x32xf32>
    %215 = math.exp %214 : vector<8x32xf32>
    %cst_57 = arith.constant 1.000000e+00 : f32
    %216 = vector.broadcast %cst_57 : f32 to vector<8x32xf32>
    %217 = arith.addf %216, %215 : vector<8x32xf32>
    %218 = arith.divf %216, %217 : vector<8x32xf32>
    %219 = arith.mulf %210, %192 : vector<8x32xf32>
    %220 = arith.mulf %204, %212 : vector<8x32xf32>
    %221 = arith.addf %219, %220 : vector<8x32xf32>
    %222 = math.tanh %221 : vector<8x32xf32>
    %223 = arith.mulf %218, %222 : vector<8x32xf32>
    %c48 = arith.constant 48 : index
    %c0_58 = arith.constant 0 : index
    %224 = vector.load %arg13[%c48, %c0_58] : memref<64x32xf32, #tpu.memory_space<vmem>>, vector<8x32xf32>
    tpu.vector_store %arg13[%c48, %c0_58], %223 {strides = array<i32>} : memref<64x32xf32, #tpu.memory_space<vmem>>, vector<8x32xf32>,
    %225 = vector.extract_strided_slice %16 {offsets = [56, 0], sizes = [8, 128], strides = [1, 1]} : vector<64x128xf32> to vector<8x128xf32>
    %cst_59 = arith.constant dense<0.000000e+00> : vector<8x128xf32>
    %226 = tpu.matmul %223, %17, %cst_59 {dimension_numbers = #tpu.dot_dimension_numbers<[1], [0], [0], [1], [0, 0, 1, 1], [], []>} : vector<8x32xf32>, vector<32x128xf32>, vector<8x128xf32> -> vector<8x128xf32>
    %227 = arith.addf %225, %226 : vector<8x128xf32>
    %228 = vector.extract_strided_slice %227 {offsets = [0, 0], sizes = [8, 32], strides = [1, 1]} : vector<8x128xf32> to vector<8x32xf32>
    %229 = arith.negf %228 : vector<8x32xf32>
    %230 = math.exp %229 : vector<8x32xf32>
    %cst_60 = arith.constant 1.000000e+00 : f32
    %231 = vector.broadcast %cst_60 : f32 to vector<8x32xf32>
    %232 = arith.addf %231, %230 : vector<8x32xf32>
    %233 = arith.divf %231, %232 : vector<8x32xf32>
    %234 = vector.extract_strided_slice %227 {offsets = [0, 32], sizes = [8, 32], strides = [1, 1]} : vector<8x128xf32> to vector<8x32xf32>
    %235 = arith.negf %234 : vector<8x32xf32>
    %236 = math.exp %235 : vector<8x32xf32>
    %cst_61 = arith.constant 1.000000e+00 : f32
    %237 = vector.broadcast %cst_61 : f32 to vector<8x32xf32>
    %238 = arith.addf %237, %236 : vector<8x32xf32>
    %239 = arith.divf %237, %238 : vector<8x32xf32>
    %240 = vector.extract_strided_slice %227 {offsets = [0, 64], sizes = [8, 32], strides = [1, 1]} : vector<8x128xf32> to vector<8x32xf32>
    %241 = math.tanh %240 : vector<8x32xf32>
    %242 = vector.extract_strided_slice %227 {offsets = [0, 96], sizes = [8, 32], strides = [1, 1]} : vector<8x128xf32> to vector<8x32xf32>
    %243 = arith.negf %242 : vector<8x32xf32>
    %244 = math.exp %243 : vector<8x32xf32>
    %cst_62 = arith.constant 1.000000e+00 : f32
    %245 = vector.broadcast %cst_62 : f32 to vector<8x32xf32>
    %246 = arith.addf %245, %244 : vector<8x32xf32>
    %247 = arith.divf %245, %246 : vector<8x32xf32>
    %248 = arith.mulf %239, %221 : vector<8x32xf32>
    %249 = arith.mulf %233, %241 : vector<8x32xf32>
    %250 = arith.addf %248, %249 : vector<8x32xf32>
    %251 = math.tanh %250 : vector<8x32xf32>
    %252 = arith.mulf %247, %251 : vector<8x32xf32>
    %c56 = arith.constant 56 : index
    %c0_63 = arith.constant 0 : index
    %253 = vector.load %arg13[%c56, %c0_63] : memref<64x32xf32, #tpu.memory_space<vmem>>, vector<8x32xf32>
    tpu.vector_store %arg13[%c56, %c0_63], %252 {strides = array<i32>} : memref<64x32xf32, #tpu.memory_space<vmem>>, vector<8x32xf32>,
    %c0_64 = arith.constant 0 : index
    %c0_65 = arith.constant 0 : index
    %254 = vector.load %arg13[%c0_64, %c0_65] : memref<64x32xf32, #tpu.memory_space<vmem>>, vector<64x32xf32>
    %c0_66 = arith.constant 0 : index
    %c0_67 = arith.constant 0 : index
    %255 = vector.load %arg9[%c0_66, %c0_67] : memref<32x17xf32, #tpu.memory_space<vmem>>, vector<32x17xf32>
    %cst_68 = arith.constant dense<0.000000e+00> : vector<64x17xf32>
    %256 = tpu.matmul %254, %255, %cst_68 {dimension_numbers = #tpu.dot_dimension_numbers<[1], [0], [0], [1], [0, 0, 1, 1], [], []>} : vector<64x32xf32>, vector<32x17xf32>, vector<64x17xf32> -> vector<64x17xf32>
    %c0_69 = arith.constant 0 : index
    %c0_70 = arith.constant 0 : index
    %257 = vector.load %arg10[%c0_69, %c0_70] : memref<1x17xf32, #tpu.memory_space<vmem>>, vector<1x17xf32>
    %258 = vector.broadcast %257 : vector<1x17xf32> to vector<64x17xf32>
    %259 = arith.addf %256, %258 : vector<64x17xf32>
    %260 = vector.extract_strided_slice %259 {offsets = [0, 1], sizes = [64, 8], strides = [1, 1]} : vector<64x17xf32> to vector<64x8xf32>
    %cst_71 = arith.constant dense<0xFF800000> : vector<64xf32>
    %261 = vector.multi_reduction <maximumf>, %260, %cst_71 [1] : vector<64x8xf32> to vector<64xf32>
    %262 = vector.shape_cast %261 : vector<64xf32> to vector<64x1xf32>
    %263 = vector.broadcast %262 : vector<64x1xf32> to vector<64x8xf32>
    %264 = arith.subf %260, %263 : vector<64x8xf32>
    %265 = math.exp %264 : vector<64x8xf32>
    %cst_72 = arith.constant dense<0.000000e+00> : vector<64xf32>
    %266 = vector.multi_reduction <add>, %265, %cst_72 [1] : vector<64x8xf32> to vector<64xf32>
    %267 = vector.shape_cast %266 : vector<64xf32> to vector<64x1xf32>
    %268 = math.log %267 : vector<64x1xf32>
    %269 = arith.addf %262, %268 : vector<64x1xf32>
    %270 = vector.extract_strided_slice %259 {offsets = [0, 0], sizes = [64, 1], strides = [1, 1]} : vector<64x17xf32> to vector<64x1xf32>
    %271 = arith.negf %270 : vector<64x1xf32>
    %272 = math.exp %271 : vector<64x1xf32>
    %cst_73 = arith.constant 1.000000e+00 : f32
    %273 = vector.broadcast %cst_73 : f32 to vector<64x1xf32>
    %274 = arith.addf %273, %272 : vector<64x1xf32>
    %275 = arith.divf %273, %274 : vector<64x1xf32>
    %c0_74 = arith.constant 0 : index
    %c0_75 = arith.constant 0 : index
    %276 = vector.load %arg11[%c0_74, %c0_75] : memref<64x17xf32, #tpu.memory_space<vmem>>, vector<64x1xf32>
    tpu.vector_store %arg11[%c0_74, %c0_75], %275 {strides = array<i32>} : memref<64x17xf32, #tpu.memory_space<vmem>>, vector<64x1xf32>,
    %277 = vector.broadcast %269 : vector<64x1xf32> to vector<64x8xf32>
    %278 = arith.subf %260, %277 : vector<64x8xf32>
    %c0_76 = arith.constant 0 : index
    %c1_77 = arith.constant 1 : index
    %279 = vector.load %arg11[%c0_76, %c1_77] : memref<64x17xf32, #tpu.memory_space<vmem>>, vector<64x8xf32>
    tpu.vector_store %arg11[%c0_76, %c1_77], %278 {strides = array<i32>} : memref<64x17xf32, #tpu.memory_space<vmem>>, vector<64x8xf32>,
    %280 = vector.extract_strided_slice %259 {offsets = [0, 9], sizes = [64, 8], strides = [1, 1]} : vector<64x17xf32> to vector<64x8xf32>
    %c0_78 = arith.constant 0 : index
    %c9 = arith.constant 9 : index
    %281 = vector.load %arg11[%c0_78, %c9] : memref<64x17xf32, #tpu.memory_space<vmem>>, vector<64x8xf32>
    tpu.vector_store %arg11[%c0_78, %c9], %280 {strides = array<i32>} : memref<64x17xf32, #tpu.memory_space<vmem>>, vector<64x8xf32>,
    %c0_79 = arith.constant 0 : index
    %c0_80 = arith.constant 0 : index
    %c0_81 = arith.constant 0 : index
    %282 = vector.load %arg12[%c0_79, %c0_80, %c0_81] : memref<2x8x32xf32, #tpu.memory_space<vmem>>, vector<1x8x32xf32>
    %283 = vector.shape_cast %282 : vector<1x8x32xf32> to vector<8x32xf32>
    %284 = vector.shape_cast %252 : vector<8x32xf32> to vector<1x8x32xf32>
    tpu.vector_store %arg12[%c0_79, %c0_80, %c0_81], %284 {strides = array<i32>} : memref<2x8x32xf32, #tpu.memory_space<vmem>>, vector<1x8x32xf32>,
    %c1_82 = arith.constant 1 : index
    %c0_83 = arith.constant 0 : index
    %c0_84 = arith.constant 0 : index
    %285 = vector.load %arg12[%c1_82, %c0_83, %c0_84] : memref<2x8x32xf32, #tpu.memory_space<vmem>>, vector<1x8x32xf32>
    %286 = vector.shape_cast %285 : vector<1x8x32xf32> to vector<8x32xf32>
    %287 = vector.shape_cast %250 : vector<8x32xf32> to vector<1x8x32xf32>
    tpu.vector_store %arg12[%c1_82, %c0_83, %c0_84], %287 {strides = array<i32>} : memref<2x8x32xf32, #tpu.memory_space<vmem>>, vector<1x8x32xf32>,
    return
  }
}

</mosaic_0001>

<llo_original>
// kernel: tpu_custom_call.1
$region0: #{tpu_custom_call.1}
  #allocation0 [shape = 'u32[]', space=smem, size = 0x4, offset = 0x4, fixed_abs, tag = 'smem constant byte address 0x4 - core index']
  #allocation1 [shape = 'u32[144,128]{1,0:T(1,128)}', space=vmem, size = 0x12000, scoped, tag = 'internal scratch']
  #allocation2 [shape = 'f32[64,32]{1,0:T(8,128)}', space=vmem, size = 0x8000, scoped, tag = 'scratch operand']
  %s0 = inlined_call_operand.vmem [shape: f32[64,8], index: 0, kind: input, shape index: {}]
  %s1 = inlined_call_operand.vmem [shape: f32[64,16], index: 1, kind: input, shape index: {}]
  %s2 = inlined_call_operand.vmem [shape: f32[2,8,32], index: 2, kind: input, shape index: {}]
  %s3 = inlined_call_operand.vmem [shape: f32[8,16], index: 3, kind: input, shape index: {}]
  %s4 = inlined_call_operand.vmem [shape: f32[1,16], index: 4, kind: input, shape index: {}]
  %s5 = inlined_call_operand.vmem [shape: f32[16,128], index: 5, kind: input, shape index: {}]
  %s6 = inlined_call_operand.vmem [shape: f32[16,128], index: 6, kind: input, shape index: {}]
  %s7 = inlined_call_operand.vmem [shape: f32[32,128], index: 7, kind: input, shape index: {}]
  %s8 = inlined_call_operand.vmem [shape: f32[1,128], index: 8, kind: input, shape index: {}]
  %s9 = inlined_call_operand.vmem [shape: f32[32,17], index: 9, kind: input, shape index: {}]
  %s10 = inlined_call_operand.vmem [shape: f32[1,17], index: 10, kind: input, shape index: {}]
  %s11 = inlined_call_operand.vmem [shape: f32[64,17], index: 11, kind: output, shape index: {0}]
  %s12 = inlined_call_operand.hbm [shape: f32[2,8,32], index: 12, kind: output, shape index: {1}]
  %13 = xla_tuple %s11, %s12
  %s14 = sld [smem:[#allocation0]]
  $region62: #{tpu_custom_call.1} parent=0
    _
  %s16 = ssub.s32 1, %s14
  %s17 = scalar_select 0, %s16, %s14
  $region1: #{tpu_custom_call.1} parent=0
    #allocation3 [shape = 'u8[8192]{0}', space=vmem, size = 0x2000, scoped, tag = 'output window, operand 1, single buffered']
    #allocation4 [shape = 's32[1]{0}', space=sflag, size = 0x4, scoped, tag = 'scoped memory for tpu_custom_call.1']
    %18 = vsyncpa [#allocation4], 0
    // Predicated region
    $region2: #{tpu_custom_call.1} parent=1 // pred_check
      _
    $region3: #{tpu_custom_call.1} parent=1 // pred_check_branch
      %20 = sbr.rel (0) target = $region5
    $region4: #{tpu_custom_call.1} parent=1 // pred_region
      _
    $region5: #{tpu_custom_call.1} parent=1 // pred_fallthru
      _
    // Predicated region
    $region6: #{tpu_custom_call.1} parent=1 // pred_check
      _
    $region7: #{tpu_custom_call.1} parent=1 // pred_check_branch
      %22 = sbr.rel (0) target = $region9
    $region8: #{tpu_custom_call.1} parent=1 // pred_region
      _
    $region9: #{tpu_custom_call.1} parent=1 // pred_fallthru
      _
    // Predicated region
    $region10: #{tpu_custom_call.1} parent=1 // pred_check
      _
    $region11: #{tpu_custom_call.1} parent=1 // pred_check_branch
      %24 = sbr.rel (0) target = $region13
    $region12: #{tpu_custom_call.1} parent=1 // pred_region
      _
    $region13: #{tpu_custom_call.1} parent=1 // pred_fallthru
      _
    // Predicated region
    $region14: #{tpu_custom_call.1} parent=1 // pred_check
      _
    $region15: #{tpu_custom_call.1} parent=1 // pred_check_branch
      %26 = sbr.rel (0) target = $region17
    $region16: #{tpu_custom_call.1} parent=1 // pred_region
      _
    $region17: #{tpu_custom_call.1} parent=1 // pred_fallthru
      _
    // Predicated region
    $region18: #{tpu_custom_call.1} parent=1 // pred_check
      _
    $region19: #{tpu_custom_call.1} parent=1 // pred_check_branch
      %28 = sbr.rel (0) target = $region21
    $region20: #{tpu_custom_call.1} parent=1 // pred_region
      _
    $region21: #{tpu_custom_call.1} parent=1 // pred_fallthru
      _
    // Predicated region
    $region22: #{tpu_custom_call.1} parent=1 // pred_check
      _
    $region23: #{tpu_custom_call.1} parent=1 // pred_check_branch
      %30 = sbr.rel (0) target = $region25
    $region24: #{tpu_custom_call.1} parent=1 // pred_region
      _
    $region25: #{tpu_custom_call.1} parent=1 // pred_fallthru
      _
    // Predicated region
    $region26: #{tpu_custom_call.1} parent=1 // pred_check
      _
    $region27: #{tpu_custom_call.1} parent=1 // pred_check_branch
      %32 = sbr.rel (0) target = $region29
    $region28: #{tpu_custom_call.1} parent=1 // pred_region
      _
    $region29: #{tpu_custom_call.1} parent=1 // pred_fallthru
      _
    // Predicated region
    $region30: #{tpu_custom_call.1} parent=1 // pred_check
      _
    $region31: #{tpu_custom_call.1} parent=1 // pred_check_branch
      %34 = sbr.rel (0) target = $region33
    $region32: #{tpu_custom_call.1} parent=1 // pred_region
      _
    $region33: #{tpu_custom_call.1} parent=1 // pred_fallthru
      _
    // Predicated region
    $region34: #{tpu_custom_call.1} parent=1 // pred_check
      _
    $region35: #{tpu_custom_call.1} parent=1 // pred_check_branch
      %36 = sbr.rel (0) target = $region37
    $region36: #{tpu_custom_call.1} parent=1 // pred_region
      _
    $region37: #{tpu_custom_call.1} parent=1 // pred_fallthru
      _
    // Predicated region
    $region38: #{tpu_custom_call.1} parent=1 // pred_check
      _
    $region39: #{tpu_custom_call.1} parent=1 // pred_check_branch
      %38 = sbr.rel (0) target = $region41
    $region40: #{tpu_custom_call.1} parent=1 // pred_region
      _
    $region41: #{tpu_custom_call.1} parent=1 // pred_fallthru
      _
    // Predicated region
    $region42: #{tpu_custom_call.1} parent=1 // pred_check
      _
    $region43: #{tpu_custom_call.1} parent=1 // pred_check_branch
      %40 = sbr.rel (0) target = $region45
    $region44: #{tpu_custom_call.1} parent=1 // pred_region
      _
    $region45: #{tpu_custom_call.1} parent=1 // pred_fallthru
      _
    %v41 = vld [vmem:[%s0] sm:$0xff]
    %v42 = vld [vmem:[%s0 + $0x8] sm:$0xff]
    %v43 = vld [vmem:[%s0 + $0x10] sm:$0xff]
    %v44 = vld [vmem:[%s0 + $0x18] sm:$0xff]
    %v45 = vld [vmem:[%s0 + $0x20] sm:$0xff]
    %v46 = vld [vmem:[%s0 + $0x28] sm:$0xff]
    %v47 = vld [vmem:[%s0 + $0x30] sm:$0xff]
    %v48 = vld [vmem:[%s0 + $0x38] sm:$0xff]
    %v49 = vld [vmem:[%s1] sm:$0xff]
    %v50 = vld [vmem:[%s1 + $0x8] sm:$0xff]
    %v51 = vld [vmem:[%s1 + $0x10] sm:$0xff]
    %v52 = vld [vmem:[%s1 + $0x18] sm:$0xff]
    %v53 = vld [vmem:[%s1 + $0x20] sm:$0xff]
    %v54 = vld [vmem:[%s1 + $0x28] sm:$0xff]
    %v55 = vld [vmem:[%s1 + $0x30] sm:$0xff]
    %v56 = vld [vmem:[%s1 + $0x38] sm:$0xff]
    %v57 = vld [vmem:[%s3] sm:$0xff]
    %v58 = vld [vmem:[%s4] sm:$0x1]
    %v60 = vlaneseq
    %v61 = vshrl.u32 %v60, 7
    %v62 = vsub.s32 0, %v61
    %v63 = vrot.slane %v58, %v62
    %vm65 = vcmask 64512
    %v67 = vsel %vm65, %v41, 0
    %v70 = vsel %vm65, %v42, 0
    %v73 = vsel %vm65, %v43, 0
    %v76 = vsel %vm65, %v44, 0
    %v79 = vsel %vm65, %v45, 0
    %v82 = vsel %vm65, %v46, 0
    %v85 = vsel %vm65, %v47, 0
    %v88 = vsel %vm65, %v48, 0
    %90 = vmatprep.subr.mxu0 0.0
    %91 = vmatpush1.msra.mxu0 %v57
    %92 = vmatprep.subr.mxu0 0.0
    %93 = vmatpush1.msra.mxu0 0.0
    %94 = vmatprep.subr.mxu0 0.0
    %95 = vmatpush1.msra.mxu0 0.0
    %96 = vmatprep.subr.mxu0 0.0
    %97 = vmatpush1.msra.mxu0 0.0
    %98 = vmatprep.subr.mxu0 0.0
    %99 = vmatpush1.msra.mxu0 0.0
    %100 = vmatprep.subr.mxu0 0.0
    %101 = vmatpush1.msra.mxu0 0.0
    %102 = vmatprep.subr.mxu0 0.0
    %103 = vmatpush1.msra.mxu0 0.0
    %104 = vmatprep.subr.mxu0 0.0
    %105 = vmatpush1.msra.mxu0 0.0
    %106 = vmatprep.subr.mxu0 0.0
    %107 = vmatpush1.msra.mxu0 0.0
    %108 = vmatprep.subr.mxu0 0.0
    %109 = vmatpush1.msra.mxu0 0.0
    %110 = vmatprep.subr.mxu0 0.0
    %111 = vmatpush1.msra.mxu0 0.0
    %112 = vmatprep.subr.mxu0 0.0
    %113 = vmatpush1.msra.mxu0 0.0
    %114 = vmatprep.subr.mxu0 0.0
    %115 = vmatpush1.msra.mxu0 0.0
    %116 = vmatprep.subr.mxu0 0.0
    %117 = vmatpush1.msra.mxu0 0.0
    %118 = vmatprep.subr.mxu0 0.0
    %119 = vmatpush1.msra.mxu0 0.0
    %120 = vmatprep.subr.mxu0 0.0
    %121 = vmatpush1.msra.mxu0 0.0
    %122 = vmatprep.subr.mxu0 0.0
    %123 = vmatpush1.msra.mxu0 0.0
    %124 = vmatprep.subr.mxu0 0.0
    %125 = vmatpush1.msra.mxu0 0.0
    %126 = vmatprep.subr.mxu0 0.0
    %127 = vmatpush1.msra.mxu0 0.0
    %128 = vmatprep.subr.mxu0 0.0
    %129 = vmatpush1.msra.mxu0 0.0
    %130 = vmatprep.subr.mxu0 0.0
    %131 = vmatpush1.msra.mxu0 0.0
    %132 = vmatprep.subr.mxu0 0.0
    %133 = vmatpush1.msra.mxu0 0.0
    %134 = vmatprep.subr.mxu0 0.0
    %135 = vmatpush1.msra.mxu0 0.0
    %136 = vmatprep.subr.mxu0 0.0
    %137 = vmatpush1.msra.mxu0 0.0
    %138 = vmatprep.subr.mxu0 0.0
    %139 = vmatpush1.msra.mxu0 0.0
    %140 = vmatprep.subr.mxu0 0.0
    %141 = vmatpush1.msra.mxu0 0.0
    %142 = vmatprep.subr.mxu0 0.0
    %143 = vmatpush1.msra.mxu0 0.0
    %144 = vmatprep.subr.mxu0 0.0
    %145 = vmatpush1.msra.mxu0 0.0
    %146 = vmatprep.subr.mxu0 0.0
    %147 = vmatpush1.msra.mxu0 0.0
    %148 = vmatprep.subr.mxu0 0.0
    %149 = vmatpush1.msra.mxu0 0.0
    %150 = vmatprep.subr.mxu0 0.0
    %151 = vmatpush1.msra.mxu0 0.0
    %152 = vmatprep.subr.mxu0 0.0
    %153 = vmatpush1.msra.mxu0 0.0
    %154 = vmatprep.mubr.f32.mxu0 0.0
    %155 = vmatmul.mubr.f32.gmra.mrb[0].mxu0 %v67
    %v156 = vpop.f32.mrb[0].mxu0
    %v157 = vadd.f32 %v63, %v156
    %v158 = vpop.f32.mrb[0].mxu0
    %159 = vmatprep.mubr.f32.mxu0 0.0
    %160 = vmatmul.mubr.f32.gmra.mrb[0].mxu0 %v70
    %v161 = vpop.f32.mrb[0].mxu0
    %v162 = vadd.f32 %v63, %v161
    %v163 = vpop.f32.mrb[0].mxu0
    %164 = vmatprep.mubr.f32.mxu0 0.0
    %165 = vmatmul.mubr.f32.gmra.mrb[0].mxu0 %v73
    %v166 = vpop.f32.mrb[0].mxu0
    %v167 = vadd.f32 %v63, %v166
    %v168 = vpop.f32.mrb[0].mxu0
    %169 = vmatprep.mubr.f32.mxu0 0.0
    %170 = vmatmul.mubr.f32.gmra.mrb[0].mxu0 %v76
    %v171 = vpop.f32.mrb[0].mxu0
    %v172 = vadd.f32 %v63, %v171
    %v173 = vpop.f32.mrb[0].mxu0
    %174 = vmatprep.mubr.f32.mxu0 0.0
    %175 = vmatmul.mubr.f32.gmra.mrb[0].mxu0 %v79
    %v176 = vpop.f32.mrb[0].mxu0
    %v177 = vadd.f32 %v63, %v176
    %v178 = vpop.f32.mrb[0].mxu0
    %179 = vmatprep.mubr.f32.mxu0 0.0
    %180 = vmatmul.mubr.f32.gmra.mrb[0].mxu0 %v82
    %v181 = vpop.f32.mrb[0].mxu0
    %v182 = vadd.f32 %v63, %v181
    %v183 = vpop.f32.mrb[0].mxu0
    %184 = vmatprep.mubr.f32.mxu0 0.0
    %185 = vmatmul.mubr.f32.gmra.mrb[0].mxu0 %v85
    %v186 = vpop.f32.mrb[0].mxu0
    %v187 = vadd.f32 %v63, %v186
    %v188 = vpop.f32.mrb[0].mxu0
    %189 = vmatprep.mubr.f32.mxu0 0.0
    %190 = vmatmul.mubr.f32.gmra.mrb[0].mxu0 %v88
    %v191 = vpop.f32.mrb[0].mxu0
    %v192 = vadd.f32 %v63, %v191
    %v193 = vpop.f32.mrb[0].mxu0
    %194 = vdwg.mxu0
    %v195 = vmax.f32 %v157, 0.0
    %v196 = vmax.f32 %v162, 0.0
    %v197 = vmax.f32 %v167, 0.0
    %v198 = vmax.f32 %v172, 0.0
    %v199 = vmax.f32 %v177, 0.0
    %v200 = vmax.f32 %v182, 0.0
    %v201 = vmax.f32 %v187, 0.0
    %v202 = vmax.f32 %v192, 0.0
    %v203 = vld [vmem:[%s5] sm:$0xff]
    %v204 = vld [vmem:[%s5 + $0x8] sm:$0xff]
    %v205 = vld [vmem:[%s6] sm:$0xff]
    %v206 = vld [vmem:[%s6 + $0x8] sm:$0xff]
    %vm207 = vcmask 130048
    %v209 = vsel %vm207, %v49, 0
    %v212 = vsel %vm207, %v50, 0
    %v215 = vsel %vm207, %v51, 0
    %v218 = vsel %vm207, %v52, 0
    %v221 = vsel %vm207, %v53, 0
    %v224 = vsel %vm207, %v54, 0
    %v227 = vsel %vm207, %v55, 0
    %v230 = vsel %vm207, %v56, 0
    %232 = vmatprep.subr.mxu0 0.0
    %233 = vmatpush1.msra.mxu0 %v205
    %234 = vmatprep.subr.mxu0 0.0
    %235 = vmatpush1.msra.mxu0 %v206
    %236 = vmatprep.subr.mxu0 0.0
    %237 = vmatpush1.msra.mxu0 0.0
    %238 = vmatprep.subr.mxu0 0.0
    %239 = vmatpush1.msra.mxu0 0.0
    %240 = vmatprep.subr.mxu0 0.0
    %241 = vmatpush1.msra.mxu0 0.0
    %242 = vmatprep.subr.mxu0 0.0
    %243 = vmatpush1.msra.mxu0 0.0
    %244 = vmatprep.subr.mxu0 0.0
    %245 = vmatpush1.msra.mxu0 0.0
    %246 = vmatprep.subr.mxu0 0.0
    %247 = vmatpush1.msra.mxu0 0.0
    %248 = vmatprep.subr.mxu0 0.0
    %249 = vmatpush1.msra.mxu0 0.0
    %250 = vmatprep.subr.mxu0 0.0
    %251 = vmatpush1.msra.mxu0 0.0
    %252 = vmatprep.subr.mxu0 0.0
    %253 = vmatpush1.msra.mxu0 0.0
    %254 = vmatprep.subr.mxu0 0.0
    %255 = vmatpush1.msra.mxu0 0.0
    %256 = vmatprep.subr.mxu0 0.0
    %257 = vmatpush1.msra.mxu0 0.0
    %258 = vmatprep.subr.mxu0 0.0
    %259 = vmatpush1.msra.mxu0 0.0
    %260 = vmatprep.subr.mxu0 0.0
    %261 = vmatpush1.msra.mxu0 0.0
    %262 = vmatprep.subr.mxu0 0.0
    %263 = vmatpush1.msra.mxu0 0.0
    %264 = vmatprep.subr.mxu0 0.0
    %265 = vmatpush1.msra.mxu0 0.0
    %266 = vmatprep.subr.mxu0 0.0
    %267 = vmatpush1.msra.mxu0 0.0
    %268 = vmatprep.subr.mxu0 0.0
    %269 = vmatpush1.msra.mxu0 0.0
    %270 = vmatprep.subr.mxu0 0.0
    %271 = vmatpush1.msra.mxu0 0.0
    %272 = vmatprep.subr.mxu0 0.0
    %273 = vmatpush1.msra.mxu0 0.0
    %274 = vmatprep.subr.mxu0 0.0
    %275 = vmatpush1.msra.mxu0 0.0
    %276 = vmatprep.subr.mxu0 0.0
    %277 = vmatpush1.msra.mxu0 0.0
    %278 = vmatprep.subr.mxu0 0.0
    %279 = vmatpush1.msra.mxu0 0.0
    %280 = vmatprep.subr.mxu0 0.0
    %281 = vmatpush1.msra.mxu0 0.0
    %282 = vmatprep.subr.mxu0 0.0
    %283 = vmatpush1.msra.mxu0 0.0
    %284 = vmatprep.subr.mxu0 0.0
    %285 = vmatpush1.msra.mxu0 0.0
    %286 = vmatprep.subr.mxu0 0.0
    %287 = vmatpush1.msra.mxu0 0.0
    %288 = vmatprep.subr.mxu0 0.0
    %289 = vmatpush1.msra.mxu0 0.0
    %290 = vmatprep.subr.mxu0 0.0
    %291 = vmatpush1.msra.mxu0 0.0
    %292 = vmatprep.subr.mxu0 0.0
    %293 = vmatpush1.msra.mxu0 0.0
    %294 = vmatprep.subr.mxu0 0.0
    %295 = vmatpush1.msra.mxu0 0.0
    %296 = vmatprep.mubr.f32.mxu0 0.0
    %297 = vmatmul.mubr.f32.gmra.mrb[0].mxu0 %v209
    %v298 = vpop.f32.mrb[0].mxu0
    %v299 = vadd.f32 0.0, %v298
    %v300 = vpop.f32.mrb[0].mxu0
    %301 = vmatprep.mubr.f32.mxu0 0.0
    %302 = vmatmul.mubr.f32.gmra.mrb[0].mxu0 %v212
    %v303 = vpop.f32.mrb[0].mxu0
    %v304 = vadd.f32 0.0, %v303
    %v305 = vpop.f32.mrb[0].mxu0
    %306 = vmatprep.mubr.f32.mxu0 0.0
    %307 = vmatmul.mubr.f32.gmra.mrb[0].mxu0 %v215
    %v308 = vpop.f32.mrb[0].mxu0
    %v309 = vadd.f32 0.0, %v308
    %v310 = vpop.f32.mrb[0].mxu0
    %311 = vmatprep.mubr.f32.mxu0 0.0
    %312 = vmatmul.mubr.f32.gmra.mrb[0].mxu0 %v218
    %v313 = vpop.f32.mrb[0].mxu0
    %v314 = vadd.f32 0.0, %v313
    %v315 = vpop.f32.mrb[0].mxu0
    %316 = vmatprep.mubr.f32.mxu0 0.0
    %317 = vmatmul.mubr.f32.gmra.mrb[0].mxu0 %v221
    %v318 = vpop.f32.mrb[0].mxu0
    %v319 = vadd.f32 0.0, %v318
    %v320 = vpop.f32.mrb[0].mxu0
    %321 = vmatprep.mubr.f32.mxu0 0.0
    %322 = vmatmul.mubr.f32.gmra.mrb[0].mxu0 %v224
    %v323 = vpop.f32.mrb[0].mxu0
    %v324 = vadd.f32 0.0, %v323
    %v325 = vpop.f32.mrb[0].mxu0
    %326 = vmatprep.mubr.f32.mxu0 0.0
    %327 = vmatmul.mubr.f32.gmra.mrb[0].mxu0 %v227
    %v328 = vpop.f32.mrb[0].mxu0
    %v329 = vadd.f32 0.0, %v328
    %v330 = vpop.f32.mrb[0].mxu0
    %331 = vmatprep.mubr.f32.mxu0 0.0
    %332 = vmatmul.mubr.f32.gmra.mrb[0].mxu0 %v230
    %v333 = vpop.f32.mrb[0].mxu0
    %v334 = vadd.f32 0.0, %v333
    %v335 = vpop.f32.mrb[0].mxu0
    %336 = vdwg.mxu0
    %v338 = vsel %vm207, %v195, 0
    %v341 = vsel %vm207, %v196, 0
    %v344 = vsel %vm207, %v197, 0
    %v347 = vsel %vm207, %v198, 0
    %v350 = vsel %vm207, %v199, 0
    %v353 = vsel %vm207, %v200, 0
    %v356 = vsel %vm207, %v201, 0
    %v359 = vsel %vm207, %v202, 0
    %361 = vmatprep.subr.mxu0 0.0
    %362 = vmatpush1.msra.mxu0 %v203
    %363 = vmatprep.subr.mxu0 0.0
    %364 = vmatpush1.msra.mxu0 %v204
    %365 = vmatprep.subr.mxu0 0.0
    %366 = vmatpush1.msra.mxu0 0.0
    %367 = vmatprep.subr.mxu0 0.0
    %368 = vmatpush1.msra.mxu0 0.0
    %369 = vmatprep.subr.mxu0 0.0
    %370 = vmatpush1.msra.mxu0 0.0
    %371 = vmatprep.subr.mxu0 0.0
    %372 = vmatpush1.msra.mxu0 0.0
    %373 = vmatprep.subr.mxu0 0.0
    %374 = vmatpush1.msra.mxu0 0.0
    %375 = vmatprep.subr.mxu0 0.0
    %376 = vmatpush1.msra.mxu0 0.0
    %377 = vmatprep.subr.mxu0 0.0
    %378 = vmatpush1.msra.mxu0 0.0
    %379 = vmatprep.subr.mxu0 0.0
    %380 = vmatpush1.msra.mxu0 0.0
    %381 = vmatprep.subr.mxu0 0.0
    %382 = vmatpush1.msra.mxu0 0.0
    %383 = vmatprep.subr.mxu0 0.0
    %384 = vmatpush1.msra.mxu0 0.0
    %385 = vmatprep.subr.mxu0 0.0
    %386 = vmatpush1.msra.mxu0 0.0
    %387 = vmatprep.subr.mxu0 0.0
    %388 = vmatpush1.msra.mxu0 0.0
    %389 = vmatprep.subr.mxu0 0.0
    %390 = vmatpush1.msra.mxu0 0.0
    %391 = vmatprep.subr.mxu0 0.0
    %392 = vmatpush1.msra.mxu0 0.0
    %393 = vmatprep.subr.mxu0 0.0
    %394 = vmatpush1.msra.mxu0 0.0
    %395 = vmatprep.subr.mxu0 0.0
    %396 = vmatpush1.msra.mxu0 0.0
    %397 = vmatprep.subr.mxu0 0.0
    %398 = vmatpush1.msra.mxu0 0.0
    %399 = vmatprep.subr.mxu0 0.0
    %400 = vmatpush1.msra.mxu0 0.0
    %401 = vmatprep.subr.mxu0 0.0
    %402 = vmatpush1.msra.mxu0 0.0
    %403 = vmatprep.subr.mxu0 0.0
    %404 = vmatpush1.msra.mxu0 0.0
    %405 = vmatprep.subr.mxu0 0.0
    %406 = vmatpush1.msra.mxu0 0.0
    %407 = vmatprep.subr.mxu0 0.0
    %408 = vmatpush1.msra.mxu0 0.0
    %409 = vmatprep.subr.mxu0 0.0
    %410 = vmatpush1.msra.mxu0 0.0
    %411 = vmatprep.subr.mxu0 0.0
    %412 = vmatpush1.msra.mxu0 0.0
    %413 = vmatprep.subr.mxu0 0.0
    %414 = vmatpush1.msra.mxu0 0.0
    %415 = vmatprep.subr.mxu0 0.0
    %416 = vmatpush1.msra.mxu0 0.0
    %417 = vmatprep.subr.mxu0 0.0
    %418 = vmatpush1.msra.mxu0 0.0
    %419 = vmatprep.subr.mxu0 0.0
    %420 = vmatpush1.msra.mxu0 0.0
    %421 = vmatprep.subr.mxu0 0.0
    %422 = vmatpush1.msra.mxu0 0.0
    %423 = vmatprep.subr.mxu0 0.0
    %424 = vmatpush1.msra.mxu0 0.0
    %425 = vmatprep.mubr.f32.mxu0 0.0
    %426 = vmatmul.mubr.f32.gmra.mrb[0].mxu0 %v338
    %v427 = vpop.f32.mrb[0].mxu0
    %v428 = vadd.f32 %v299, %v427
    %v429 = vpop.f32.mrb[0].mxu0
    %430 = vmatprep.mubr.f32.mxu0 0.0
    %431 = vmatmul.mubr.f32.gmra.mrb[0].mxu0 %v341
    %v432 = vpop.f32.mrb[0].mxu0
    %v433 = vadd.f32 %v304, %v432
    %v434 = vpop.f32.mrb[0].mxu0
    %435 = vmatprep.mubr.f32.mxu0 0.0
    %436 = vmatmul.mubr.f32.gmra.mrb[0].mxu0 %v344
    %v437 = vpop.f32.mrb[0].mxu0
    %v438 = vadd.f32 %v309, %v437
    %v439 = vpop.f32.mrb[0].mxu0
    %440 = vmatprep.mubr.f32.mxu0 0.0
    %441 = vmatmul.mubr.f32.gmra.mrb[0].mxu0 %v347
    %v442 = vpop.f32.mrb[0].mxu0
    %v443 = vadd.f32 %v314, %v442
    %v444 = vpop.f32.mrb[0].mxu0
    %445 = vmatprep.mubr.f32.mxu0 0.0
    %446 = vmatmul.mubr.f32.gmra.mrb[0].mxu0 %v350
    %v447 = vpop.f32.mrb[0].mxu0
    %v448 = vadd.f32 %v319, %v447
    %v449 = vpop.f32.mrb[0].mxu0
    %450 = vmatprep.mubr.f32.mxu0 0.0
    %451 = vmatmul.mubr.f32.gmra.mrb[0].mxu0 %v353
    %v452 = vpop.f32.mrb[0].mxu0
    %v453 = vadd.f32 %v324, %v452
    %v454 = vpop.f32.mrb[0].mxu0
    %455 = vmatprep.mubr.f32.mxu0 0.0
    %456 = vmatmul.mubr.f32.gmra.mrb[0].mxu0 %v356
    %v457 = vpop.f32.mrb[0].mxu0
    %v458 = vadd.f32 %v329, %v457
    %v459 = vpop.f32.mrb[0].mxu0
    %460 = vmatprep.mubr.f32.mxu0 0.0
    %461 = vmatmul.mubr.f32.gmra.mrb[0].mxu0 %v359
    %v462 = vpop.f32.mrb[0].mxu0
    %v463 = vadd.f32 %v334, %v462
    %v464 = vpop.f32.mrb[0].mxu0
    %465 = vdwg.mxu0
    %v466 = vld [vmem:[%s8] sm:$0x1]
    %v468 = vlaneseq
    %v469 = vshrl.u32 %v468, 7
    %v470 = vsub.s32 0, %v469
    %v471 = vrot.slane %v466, %v470
    %v473 = vadd.f32 %v428, %v471
    %v474 = vadd.f32 %v433, %v471
    %v475 = vadd.f32 %v438, %v471
    %v476 = vadd.f32 %v443, %v471
    %v477 = vadd.f32 %v448, %v471
    %v478 = vadd.f32 %v453, %v471
    %v479 = vadd.f32 %v458, %v471
    %v480 = vadd.f32 %v463, %v471
    %v481 = vld [vmem:[%s7] sm:$0xff]
    %v482 = vld [vmem:[%s7 + $0x8] sm:$0xff]
    %v483 = vld [vmem:[%s7 + $0x10] sm:$0xff]
    %v484 = vld [vmem:[%s7 + $0x18] sm:$0xff]
    %v485 = vld [vmem:[%s2] sm:$0xff]
    %s486 = scalar_lea.vmem %s2, 8
    %v487 = vld [vmem:[%s486] sm:$0xff]
    %vm488 = vcmask 261120
    %v490 = vsel %vm488, %v485, 0
    %492 = vmatprep.subr.mxu0 0.0
    %493 = vmatpush1.msra.mxu0 %v481
    %494 = vmatprep.subr.mxu0 0.0
    %495 = vmatpush1.msra.mxu0 %v482
    %496 = vmatprep.subr.mxu0 0.0
    %497 = vmatpush1.msra.mxu0 %v483
    %498 = vmatprep.subr.mxu0 0.0
    %499 = vmatpush1.msra.mxu0 %v484
    %500 = vmatprep.subr.mxu0 0.0
    %501 = vmatpush1.msra.mxu0 0.0
    %502 = vmatprep.subr.mxu0 0.0
    %503 = vmatpush1.msra.mxu0 0.0
    %504 = vmatprep.subr.mxu0 0.0
    %505 = vmatpush1.msra.mxu0 0.0
    %506 = vmatprep.subr.mxu0 0.0
    %507 = vmatpush1.msra.mxu0 0.0
    %508 = vmatprep.subr.mxu0 0.0
    %509 = vmatpush1.msra.mxu0 0.0
    %510 = vmatprep.subr.mxu0 0.0
    %511 = vmatpush1.msra.mxu0 0.0
    %512 = vmatprep.subr.mxu0 0.0
    %513 = vmatpush1.msra.mxu0 0.0
    %514 = vmatprep.subr.mxu0 0.0
    %515 = vmatpush1.msra.mxu0 0.0
    %516 = vmatprep.subr.mxu0 0.0
    %517 = vmatpush1.msra.mxu0 0.0
    %518 = vmatprep.subr.mxu0 0.0
    %519 = vmatpush1.msra.mxu0 0.0
    %520 = vmatprep.subr.mxu0 0.0
    %521 = vmatpush1.msra.mxu0 0.0
    %522 = vmatprep.subr.mxu0 0.0
    %523 = vmatpush1.msra.mxu0 0.0
    %524 = vmatprep.subr.mxu0 0.0
    %525 = vmatpush1.msra.mxu0 0.0
    %526 = vmatprep.subr.mxu0 0.0
    %527 = vmatpush1.msra.mxu0 0.0
    %528 = vmatprep.subr.mxu0 0.0
    %529 = vmatpush1.msra.mxu0 0.0
    %530 = vmatprep.subr.mxu0 0.0
    %531 = vmatpush1.msra.mxu0 0.0
    %532 = vmatprep.subr.mxu0 0.0
    %533 = vmatpush1.msra.mxu0 0.0
    %534 = vmatprep.subr.mxu0 0.0
    %535 = vmatpush1.msra.mxu0 0.0
    %536 = vmatprep.subr.mxu0 0.0
    %537 = vmatpush1.msra.mxu0 0.0
    %538 = vmatprep.subr.mxu0 0.0
    %539 = vmatpush1.msra.mxu0 0.0
    %540 = vmatprep.subr.mxu0 0.0
    %541 = vmatpush1.msra.mxu0 0.0
    %542 = vmatprep.subr.mxu0 0.0
    %543 = vmatpush1.msra.mxu0 0.0
    %544 = vmatprep.subr.mxu0 0.0
    %545 = vmatpush1.msra.mxu0 0.0
    %546 = vmatprep.subr.mxu0 0.0
    %547 = vmatpush1.msra.mxu0 0.0
    %548 = vmatprep.subr.mxu0 0.0
    %549 = vmatpush1.msra.mxu0 0.0
    %550 = vmatprep.subr.mxu0 0.0
    %551 = vmatpush1.msra.mxu0 0.0
    %552 = vmatprep.subr.mxu0 0.0
    %553 = vmatpush1.msra.mxu0 0.0
    %554 = vmatprep.subr.mxu0 0.0
    %555 = vmatpush1.msra.mxu0 0.0
    %556 = vmatprep.mubr.f32.mxu0 0.0
    %557 = vmatmul.mubr.f32.gmra.mrb[0].mxu0 %v490
    %v558 = vpop.f32.mrb[0].mxu0
    %v559 = vadd.f32 0.0, %v558
    %v560 = vpop.f32.mrb[0].mxu0
    %561 = vdwg.mxu0
    %v562 = vadd.f32 %v473, %v559
    %v563 = vxor.u32 %v562, 2147483648
    %v564 = vmul.f32 %v563, 1.442695
    %v565 = vpow.pop %v564
    %v566 = vadd.f32 %v565, 1.0
    %v567 = vrcp.pop %v566
    %v568 = vmul.f32 1.0, %v567
    %v569 = vtanh.pop %v562
    %571 = vrot.lane.b32.xlu0 %v487, 32
    %v572 = vpop.permute.xlu0 %571
    %v574 = vmul.f32 %v568, %v572
    %576 = vrot.lane.b32.xlu0 %v569, 64
    %v577 = vpop.permute.xlu0 %576
    %v579 = vmul.f32 %v568, %v577
    %581 = vrot.lane.b32.xlu0 %v579, 32
    %v582 = vpop.permute.xlu0 %581
    %v584 = vadd.f32 %v574, %v582
    %v585 = vtanh.pop %v584
    %587 = vrot.lane.b32.xlu0 %v585, 64
    %v588 = vpop.permute.xlu0 %587
    %v590 = vmul.f32 %v568, %v588
    %592 = vrot.lane.b32.xlu0 %v590, 32
    %v593 = vpop.permute.xlu0 %592
    %595 = vst.msk [vmem:[#allocation2] sm:$0xff] %vm488, %v593
    %v596 = vsel %vm488, %v593, 0
    %598 = vmatprep.subr.mxu0 0.0
    %599 = vmatpush1.msra.mxu0 %v481
    %600 = vmatprep.subr.mxu0 0.0
    %601 = vmatpush1.msra.mxu0 %v482
    %602 = vmatprep.subr.mxu0 0.0
    %603 = vmatpush1.msra.mxu0 %v483
    %604 = vmatprep.subr.mxu0 0.0
    %605 = vmatpush1.msra.mxu0 %v484
    %606 = vmatprep.subr.mxu0 0.0
    %607 = vmatpush1.msra.mxu0 0.0
    %608 = vmatprep.subr.mxu0 0.0
    %609 = vmatpush1.msra.mxu0 0.0
    %610 = vmatprep.subr.mxu0 0.0
    %611 = vmatpush1.msra.mxu0 0.0
    %612 = vmatprep.subr.mxu0 0.0
    %613 = vmatpush1.msra.mxu0 0.0
    %614 = vmatprep.subr.mxu0 0.0
    %615 = vmatpush1.msra.mxu0 0.0
    %616 = vmatprep.subr.mxu0 0.0
    %617 = vmatpush1.msra.mxu0 0.0
    %618 = vmatprep.subr.mxu0 0.0
    %619 = vmatpush1.msra.mxu0 0.0
    %620 = vmatprep.subr.mxu0 0.0
    %621 = vmatpush1.msra.mxu0 0.0
    %622 = vmatprep.subr.mxu0 0.0
    %623 = vmatpush1.msra.mxu0 0.0
    %624 = vmatprep.subr.mxu0 0.0
    %625 = vmatpush1.msra.mxu0 0.0
    %626 = vmatprep.subr.mxu0 0.0
    %627 = vmatpush1.msra.mxu0 0.0
    %628 = vmatprep.subr.mxu0 0.0
    %629 = vmatpush1.msra.mxu0 0.0
    %630 = vmatprep.subr.mxu0 0.0
    %631 = vmatpush1.msra.mxu0 0.0
    %632 = vmatprep.subr.mxu0 0.0
    %633 = vmatpush1.msra.mxu0 0.0
    %634 = vmatprep.subr.mxu0 0.0
    %635 = vmatpush1.msra.mxu0 0.0
    %636 = vmatprep.subr.mxu0 0.0
    %637 = vmatpush1.msra.mxu0 0.0
    %638 = vmatprep.subr.mxu0 0.0
    %639 = vmatpush1.msra.mxu0 0.0
    %640 = vmatprep.subr.mxu0 0.0
    %641 = vmatpush1.msra.mxu0 0.0
    %642 = vmatprep.subr.mxu0 0.0
    %643 = vmatpush1.msra.mxu0 0.0
    %644 = vmatprep.subr.mxu0 0.0
    %645 = vmatpush1.msra.mxu0 0.0
    %646 = vmatprep.subr.mxu0 0.0
    %647 = vmatpush1.msra.mxu0 0.0
    %648 = vmatprep.subr.mxu0 0.0
    %649 = vmatpush1.msra.mxu0 0.0
    %650 = vmatprep.subr.mxu0 0.0
    %651 = vmatpush1.msra.mxu0 0.0
    %652 = vmatprep.subr.mxu0 0.0
    %653 = vmatpush1.msra.mxu0 0.0
    %654 = vmatprep.subr.mxu0 0.0
    %655 = vmatpush1.msra.mxu0 0.0
    %656 = vmatprep.subr.mxu0 0.0
    %657 = vmatpush1.msra.mxu0 0.0
    %658 = vmatprep.subr.mxu0 0.0
    %659 = vmatpush1.msra.mxu0 0.0
    %660 = vmatprep.subr.mxu0 0.0
    %661 = vmatpush1.msra.mxu0 0.0
    %662 = vmatprep.mubr.f32.mxu0 0.0
    %663 = vmatmul.mubr.f32.gmra.mrb[0].mxu0 %v596
    %v664 = vpop.f32.mrb[0].mxu0
    %v665 = vadd.f32 0.0, %v664
    %v666 = vpop.f32.mrb[0].mxu0
    %667 = vdwg.mxu0
    %v668 = vadd.f32 %v474, %v665
    %v669 = vxor.u32 %v668, 2147483648
    %v670 = vmul.f32 %v669, 1.442695
    %v671 = vpow.pop %v670
    %v672 = vadd.f32 %v671, 1.0
    %v673 = vrcp.pop %v672
    %v674 = vmul.f32 1.0, %v673
    %v675 = vtanh.pop %v668
    %v676 = vmul.f32 %v674, %v584
    %678 = vrot.lane.b32.xlu0 %v675, 64
    %v679 = vpop.permute.xlu0 %678
    %v681 = vmul.f32 %v674, %v679
    %683 = vrot.lane.b32.xlu0 %v681, 32
    %v684 = vpop.permute.xlu0 %683
    %v686 = vadd.f32 %v676, %v684
    %v687 = vtanh.pop %v686
    %689 = vrot.lane.b32.xlu0 %v687, 64
    %v690 = vpop.permute.xlu0 %689
    %v692 = vmul.f32 %v674, %v690
    %694 = vrot.lane.b32.xlu0 %v692, 32
    %v695 = vpop.permute.xlu0 %694
    %697 = vst.msk [vmem:[#allocation2 + $0x8] sm:$0xff] %vm488, %v695
    %v698 = vsel %vm488, %v695, 0
    %700 = vmatprep.subr.mxu0 0.0
    %701 = vmatpush1.msra.mxu0 %v481
    %702 = vmatprep.subr.mxu0 0.0
    %703 = vmatpush1.msra.mxu0 %v482
    %704 = vmatprep.subr.mxu0 0.0
    %705 = vmatpush1.msra.mxu0 %v483
    %706 = vmatprep.subr.mxu0 0.0
    %707 = vmatpush1.msra.mxu0 %v484
    %708 = vmatprep.subr.mxu0 0.0
    %709 = vmatpush1.msra.mxu0 0.0
    %710 = vmatprep.subr.mxu0 0.0
    %711 = vmatpush1.msra.mxu0 0.0
    %712 = vmatprep.subr.mxu0 0.0
    %713 = vmatpush1.msra.mxu0 0.0
    %714 = vmatprep.subr.mxu0 0.0
    %715 = vmatpush1.msra.mxu0 0.0
    %716 = vmatprep.subr.mxu0 0.0
    %717 = vmatpush1.msra.mxu0 0.0
    %718 = vmatprep.subr.mxu0 0.0
    %719 = vmatpush1.msra.mxu0 0.0
    %720 = vmatprep.subr.mxu0 0.0
    %721 = vmatpush1.msra.mxu0 0.0
    %722 = vmatprep.subr.mxu0 0.0
    %723 = vmatpush1.msra.mxu0 0.0
    %724 = vmatprep.subr.mxu0 0.0
    %725 = vmatpush1.msra.mxu0 0.0
    %726 = vmatprep.subr.mxu0 0.0
    %727 = vmatpush1.msra.mxu0 0.0
    %728 = vmatprep.subr.mxu0 0.0
    %729 = vmatpush1.msra.mxu0 0.0
    %730 = vmatprep.subr.mxu0 0.0
    %731 = vmatpush1.msra.mxu0 0.0
    %732 = vmatprep.subr.mxu0 0.0
    %733 = vmatpush1.msra.mxu0 0.0
    %734 = vmatprep.subr.mxu0 0.0
    %735 = vmatpush1.msra.mxu0 0.0
    %736 = vmatprep.subr.mxu0 0.0
    %737 = vmatpush1.msra.mxu0 0.0
    %738 = vmatprep.subr.mxu0 0.0
    %739 = vmatpush1.msra.mxu0 0.0
    %740 = vmatprep.subr.mxu0 0.0
    %741 = vmatpush1.msra.mxu0 0.0
    %742 = vmatprep.subr.mxu0 0.0
    %743 = vmatpush1.msra.mxu0 0.0
    %744 = vmatprep.subr.mxu0 0.0
    %745 = vmatpush1.msra.mxu0 0.0
    %746 = vmatprep.subr.mxu0 0.0
    %747 = vmatpush1.msra.mxu0 0.0
    %748 = vmatprep.subr.mxu0 0.0
    %749 = vmatpush1.msra.mxu0 0.0
    %750 = vmatprep.subr.mxu0 0.0
    %751 = vmatpush1.msra.mxu0 0.0
    %752 = vmatprep.subr.mxu0 0.0
    %753 = vmatpush1.msra.mxu0 0.0
    %754 = vmatprep.subr.mxu0 0.0
    %755 = vmatpush1.msra.mxu0 0.0
    %756 = vmatprep.subr.mxu0 0.0
    %757 = vmatpush1.msra.mxu0 0.0
    %758 = vmatprep.subr.mxu0 0.0
    %759 = vmatpush1.msra.mxu0 0.0
    %760 = vmatprep.subr.mxu0 0.0
    %761 = vmatpush1.msra.mxu0 0.0
    %762 = vmatprep.subr.mxu0 0.0
    %763 = vmatpush1.msra.mxu0 0.0
    %764 = vmatprep.mubr.f32.mxu0 0.0
    %765 = vmatmul.mubr.f32.gmra.mrb[0].mxu0 %v698
    %v766 = vpop.f32.mrb[0].mxu0
    %v767 = vadd.f32 0.0, %v766
    %v768 = vpop.f32.mrb[0].mxu0
    %769 = vdwg.mxu0
    %v770 = vadd.f32 %v475, %v767
    %v771 = vxor.u32 %v770, 2147483648
    %v772 = vmul.f32 %v771, 1.442695
    %v773 = vpow.pop %v772
    %v774 = vadd.f32 %v773, 1.0
    %v775 = vrcp.pop %v774
    %v776 = vmul.f32 1.0, %v775
    %v777 = vtanh.pop %v770
    %v778 = vmul.f32 %v776, %v686
    %780 = vrot.lane.b32.xlu0 %v777, 64
    %v781 = vpop.permute.xlu0 %780
    %v783 = vmul.f32 %v776, %v781
    %785 = vrot.lane.b32.xlu0 %v783, 32
    %v786 = vpop.permute.xlu0 %785
    %v788 = vadd.f32 %v778, %v786
    %v789 = vtanh.pop %v788
    %791 = vrot.lane.b32.xlu0 %v789, 64
    %v792 = vpop.permute.xlu0 %791
    %v794 = vmul.f32 %v776, %v792
    %796 = vrot.lane.b32.xlu0 %v794, 32
    %v797 = vpop.permute.xlu0 %796
    %799 = vst.msk [vmem:[#allocation2 + $0x10] sm:$0xff] %vm488, %v797
    %v800 = vsel %vm488, %v797, 0
    %802 = vmatprep.subr.mxu0 0.0
    %803 = vmatpush1.msra.mxu0 %v481
    %804 = vmatprep.subr.mxu0 0.0
    %805 = vmatpush1.msra.mxu0 %v482
    %806 = vmatprep.subr.mxu0 0.0
    %807 = vmatpush1.msra.mxu0 %v483
    %808 = vmatprep.subr.mxu0 0.0
    %809 = vmatpush1.msra.mxu0 %v484
    %810 = vmatprep.subr.mxu0 0.0
    %811 = vmatpush1.msra.mxu0 0.0
    %812 = vmatprep.subr.mxu0 0.0
    %813 = vmatpush1.msra.mxu0 0.0
    %814 = vmatprep.subr.mxu0 0.0
    %815 = vmatpush1.msra.mxu0 0.0
    %816 = vmatprep.subr.mxu0 0.0
    %817 = vmatpush1.msra.mxu0 0.0
    %818 = vmatprep.subr.mxu0 0.0
    %819 = vmatpush1.msra.mxu0 0.0
    %820 = vmatprep.subr.mxu0 0.0
    %821 = vmatpush1.msra.mxu0 0.0
    %822 = vmatprep.subr.mxu0 0.0
    %823 = vmatpush1.msra.mxu0 0.0
    %824 = vmatprep.subr.mxu0 0.0
    %825 = vmatpush1.msra.mxu0 0.0
    %826 = vmatprep.subr.mxu0 0.0
    %827 = vmatpush1.msra.mxu0 0.0
    %828 = vmatprep.subr.mxu0 0.0
    %829 = vmatpush1.msra.mxu0 0.0
    %830 = vmatprep.subr.mxu0 0.0
    %831 = vmatpush1.msra.mxu0 0.0
    %832 = vmatprep.subr.mxu0 0.0
    %833 = vmatpush1.msra.mxu0 0.0
    %834 = vmatprep.subr.mxu0 0.0
    %835 = vmatpush1.msra.mxu0 0.0
    %836 = vmatprep.subr.mxu0 0.0
    %837 = vmatpush1.msra.mxu0 0.0
    %838 = vmatprep.subr.mxu0 0.0
    %839 = vmatpush1.msra.mxu0 0.0
    %840 = vmatprep.subr.mxu0 0.0
    %841 = vmatpush1.msra.mxu0 0.0
    %842 = vmatprep.subr.mxu0 0.0
    %843 = vmatpush1.msra.mxu0 0.0
    %844 = vmatprep.subr.mxu0 0.0
    %845 = vmatpush1.msra.mxu0 0.0
    %846 = vmatprep.subr.mxu0 0.0
    %847 = vmatpush1.msra.mxu0 0.0
    %848 = vmatprep.subr.mxu0 0.0
    %849 = vmatpush1.msra.mxu0 0.0
    %850 = vmatprep.subr.mxu0 0.0
    %851 = vmatpush1.msra.mxu0 0.0
    %852 = vmatprep.subr.mxu0 0.0
    %853 = vmatpush1.msra.mxu0 0.0
    %854 = vmatprep.subr.mxu0 0.0
    %855 = vmatpush1.msra.mxu0 0.0
    %856 = vmatprep.subr.mxu0 0.0
    %857 = vmatpush1.msra.mxu0 0.0
    %858 = vmatprep.subr.mxu0 0.0
    %859 = vmatpush1.msra.mxu0 0.0
    %860 = vmatprep.subr.mxu0 0.0
    %861 = vmatpush1.msra.mxu0 0.0
    %862 = vmatprep.subr.mxu0 0.0
    %863 = vmatpush1.msra.mxu0 0.0
    %864 = vmatprep.subr.mxu0 0.0
    %865 = vmatpush1.msra.mxu0 0.0
    %866 = vmatprep.mubr.f32.mxu0 0.0
    %867 = vmatmul.mubr.f32.gmra.mrb[0].mxu0 %v800
    %v868 = vpop.f32.mrb[0].mxu0
    %v869 = vadd.f32 0.0, %v868
    %v870 = vpop.f32.mrb[0].mxu0
    %871 = vdwg.mxu0
    %v872 = vadd.f32 %v476, %v869
    %v873 = vxor.u32 %v872, 2147483648
    %v874 = vmul.f32 %v873, 1.442695
    %v875 = vpow.pop %v874
    %v876 = vadd.f32 %v875, 1.0
    %v877 = vrcp.pop %v876
    %v878 = vmul.f32 1.0, %v877
    %v879 = vtanh.pop %v872
    %v880 = vmul.f32 %v878, %v788
    %882 = vrot.lane.b32.xlu0 %v879, 64
    %v883 = vpop.permute.xlu0 %882
    %v885 = vmul.f32 %v878, %v883
    %887 = vrot.lane.b32.xlu0 %v885, 32
    %v888 = vpop.permute.xlu0 %887
    %v890 = vadd.f32 %v880, %v888
    %v891 = vtanh.pop %v890
    %893 = vrot.lane.b32.xlu0 %v891, 64
    %v894 = vpop.permute.xlu0 %893
    %v896 = vmul.f32 %v878, %v894
    %898 = vrot.lane.b32.xlu0 %v896, 32
    %v899 = vpop.permute.xlu0 %898
    %901 = vst.msk [vmem:[#allocation2 + $0x18] sm:$0xff] %vm488, %v899
    %v902 = vsel %vm488, %v899, 0
    %904 = vmatprep.subr.mxu0 0.0
    %905 = vmatpush1.msra.mxu0 %v481
    %906 = vmatprep.subr.mxu0 0.0
    %907 = vmatpush1.msra.mxu0 %v482
    %908 = vmatprep.subr.mxu0 0.0
    %909 = vmatpush1.msra.mxu0 %v483
    %910 = vmatprep.subr.mxu0 0.0
    %911 = vmatpush1.msra.mxu0 %v484
    %912 = vmatprep.subr.mxu0 0.0
    %913 = vmatpush1.msra.mxu0 0.0
    %914 = vmatprep.subr.mxu0 0.0
    %915 = vmatpush1.msra.mxu0 0.0
    %916 = vmatprep.subr.mxu0 0.0
    %917 = vmatpush1.msra.mxu0 0.0
    %918 = vmatprep.subr.mxu0 0.0
    %919 = vmatpush1.msra.mxu0 0.0
    %920 = vmatprep.subr.mxu0 0.0
    %921 = vmatpush1.msra.mxu0 0.0
    %922 = vmatprep.subr.mxu0 0.0
    %923 = vmatpush1.msra.mxu0 0.0
    %924 = vmatprep.subr.mxu0 0.0
    %925 = vmatpush1.msra.mxu0 0.0
    %926 = vmatprep.subr.mxu0 0.0
    %927 = vmatpush1.msra.mxu0 0.0
    %928 = vmatprep.subr.mxu0 0.0
    %929 = vmatpush1.msra.mxu0 0.0
    %930 = vmatprep.subr.mxu0 0.0
    %931 = vmatpush1.msra.mxu0 0.0
    %932 = vmatprep.subr.mxu0 0.0
    %933 = vmatpush1.msra.mxu0 0.0
    %934 = vmatprep.subr.mxu0 0.0
    %935 = vmatpush1.msra.mxu0 0.0
    %936 = vmatprep.subr.mxu0 0.0
    %937 = vmatpush1.msra.mxu0 0.0
    %938 = vmatprep.subr.mxu0 0.0
    %939 = vmatpush1.msra.mxu0 0.0
    %940 = vmatprep.subr.mxu0 0.0
    %941 = vmatpush1.msra.mxu0 0.0
    %942 = vmatprep.subr.mxu0 0.0
    %943 = vmatpush1.msra.mxu0 0.0
    %944 = vmatprep.subr.mxu0 0.0
    %945 = vmatpush1.msra.mxu0 0.0
    %946 = vmatprep.subr.mxu0 0.0
    %947 = vmatpush1.msra.mxu0 0.0
    %948 = vmatprep.subr.mxu0 0.0
    %949 = vmatpush1.msra.mxu0 0.0
    %950 = vmatprep.subr.mxu0 0.0
    %951 = vmatpush1.msra.mxu0 0.0
    %952 = vmatprep.subr.mxu0 0.0
    %953 = vmatpush1.msra.mxu0 0.0
    %954 = vmatprep.subr.mxu0 0.0
    %955 = vmatpush1.msra.mxu0 0.0
    %956 = vmatprep.subr.mxu0 0.0
    %957 = vmatpush1.msra.mxu0 0.0
    %958 = vmatprep.subr.mxu0 0.0
    %959 = vmatpush1.msra.mxu0 0.0
    %960 = vmatprep.subr.mxu0 0.0
    %961 = vmatpush1.msra.mxu0 0.0
    %962 = vmatprep.subr.mxu0 0.0
    %963 = vmatpush1.msra.mxu0 0.0
    %964 = vmatprep.subr.mxu0 0.0
    %965 = vmatpush1.msra.mxu0 0.0
    %966 = vmatprep.subr.mxu0 0.0
    %967 = vmatpush1.msra.mxu0 0.0
    %968 = vmatprep.mubr.f32.mxu0 0.0
    %969 = vmatmul.mubr.f32.gmra.mrb[0].mxu0 %v902
    %v970 = vpop.f32.mrb[0].mxu0
    %v971 = vadd.f32 0.0, %v970
    %v972 = vpop.f32.mrb[0].mxu0
    %973 = vdwg.mxu0
    %v974 = vadd.f32 %v477, %v971
    %v975 = vxor.u32 %v974, 2147483648
    %v976 = vmul.f32 %v975, 1.442695
    %v977 = vpow.pop %v976
    %v978 = vadd.f32 %v977, 1.0
    %v979 = vrcp.pop %v978
    %v980 = vmul.f32 1.0, %v979
    %v981 = vtanh.pop %v974
    %v982 = vmul.f32 %v980, %v890
    %984 = vrot.lane.b32.xlu0 %v981, 64
    %v985 = vpop.permute.xlu0 %984
    %v987 = vmul.f32 %v980, %v985
    %989 = vrot.lane.b32.xlu0 %v987, 32
    %v990 = vpop.permute.xlu0 %989
    %v992 = vadd.f32 %v982, %v990
    %v993 = vtanh.pop %v992
    %995 = vrot.lane.b32.xlu0 %v993, 64
    %v996 = vpop.permute.xlu0 %995
    %v998 = vmul.f32 %v980, %v996
    %1000 = vrot.lane.b32.xlu0 %v998, 32
    %v1001 = vpop.permute.xlu0 %1000
    %1003 = vst.msk [vmem:[#allocation2 + $0x20] sm:$0xff] %vm488, %v1001
    %v1004 = vsel %vm488, %v1001, 0
    %1006 = vmatprep.subr.mxu0 0.0
    %1007 = vmatpush1.msra.mxu0 %v481
    %1008 = vmatprep.subr.mxu0 0.0
    %1009 = vmatpush1.msra.mxu0 %v482
    %1010 = vmatprep.subr.mxu0 0.0
    %1011 = vmatpush1.msra.mxu0 %v483
    %1012 = vmatprep.subr.mxu0 0.0
    %1013 = vmatpush1.msra.mxu0 %v484
    %1014 = vmatprep.subr.mxu0 0.0
    %1015 = vmatpush1.msra.mxu0 0.0
    %1016 = vmatprep.subr.mxu0 0.0
    %1017 = vmatpush1.msra.mxu0 0.0
    %1018 = vmatprep.subr.mxu0 0.0
    %1019 = vmatpush1.msra.mxu0 0.0
    %1020 = vmatprep.subr.mxu0 0.0
    %1021 = vmatpush1.msra.mxu0 0.0
    %1022 = vmatprep.subr.mxu0 0.0
    %1023 = vmatpush1.msra.mxu0 0.0
    %1024 = vmatprep.subr.mxu0 0.0
    %1025 = vmatpush1.msra.mxu0 0.0
    %1026 = vmatprep.subr.mxu0 0.0
    %1027 = vmatpush1.msra.mxu0 0.0
    %1028 = vmatprep.subr.mxu0 0.0
    %1029 = vmatpush1.msra.mxu0 0.0
    %1030 = vmatprep.subr.mxu0 0.0
    %1031 = vmatpush1.msra.mxu0 0.0
    %1032 = vmatprep.subr.mxu0 0.0
    %1033 = vmatpush1.msra.mxu0 0.0
    %1034 = vmatprep.subr.mxu0 0.0
    %1035 = vmatpush1.msra.mxu0 0.0
    %1036 = vmatprep.subr.mxu0 0.0
    %1037 = vmatpush1.msra.mxu0 0.0
    %1038 = vmatprep.subr.mxu0 0.0
    %1039 = vmatpush1.msra.mxu0 0.0
    %1040 = vmatprep.subr.mxu0 0.0
    %1041 = vmatpush1.msra.mxu0 0.0
    %1042 = vmatprep.subr.mxu0 0.0
    %1043 = vmatpush1.msra.mxu0 0.0
    %1044 = vmatprep.subr.mxu0 0.0
    %1045 = vmatpush1.msra.mxu0 0.0
    %1046 = vmatprep.subr.mxu0 0.0
    %1047 = vmatpush1.msra.mxu0 0.0
    %1048 = vmatprep.subr.mxu0 0.0
    %1049 = vmatpush1.msra.mxu0 0.0
    %1050 = vmatprep.subr.mxu0 0.0
    %1051 = vmatpush1.msra.mxu0 0.0
    %1052 = vmatprep.subr.mxu0 0.0
    %1053 = vmatpush1.msra.mxu0 0.0
    %1054 = vmatprep.subr.mxu0 0.0
    %1055 = vmatpush1.msra.mxu0 0.0
    %1056 = vmatprep.subr.mxu0 0.0
    %1057 = vmatpush1.msra.mxu0 0.0
    %1058 = vmatprep.subr.mxu0 0.0
    %1059 = vmatpush1.msra.mxu0 0.0
    %1060 = vmatprep.subr.mxu0 0.0
    %1061 = vmatpush1.msra.mxu0 0.0
    %1062 = vmatprep.subr.mxu0 0.0
    %1063 = vmatpush1.msra.mxu0 0.0
    %1064 = vmatprep.subr.mxu0 0.0
    %1065 = vmatpush1.msra.mxu0 0.0
    %1066 = vmatprep.subr.mxu0 0.0
    %1067 = vmatpush1.msra.mxu0 0.0
    %1068 = vmatprep.subr.mxu0 0.0
    %1069 = vmatpush1.msra.mxu0 0.0
    %1070 = vmatprep.mubr.f32.mxu0 0.0
    %1071 = vmatmul.mubr.f32.gmra.mrb[0].mxu0 %v1004
    %v1072 = vpop.f32.mrb[0].mxu0
    %v1073 = vadd.f32 0.0, %v1072
    %v1074 = vpop.f32.mrb[0].mxu0
    %1075 = vdwg.mxu0
    %v1076 = vadd.f32 %v478, %v1073
    %v1077 = vxor.u32 %v1076, 2147483648
    %v1078 = vmul.f32 %v1077, 1.442695
    %v1079 = vpow.pop %v1078
    %v1080 = vadd.f32 %v1079, 1.0
    %v1081 = vrcp.pop %v1080
    %v1082 = vmul.f32 1.0, %v1081
    %v1083 = vtanh.pop %v1076
    %v1084 = vmul.f32 %v1082, %v992
    %1086 = vrot.lane.b32.xlu0 %v1083, 64
    %v1087 = vpop.permute.xlu0 %1086
    %v1089 = vmul.f32 %v1082, %v1087
    %1091 = vrot.lane.b32.xlu0 %v1089, 32
    %v1092 = vpop.permute.xlu0 %1091
    %v1094 = vadd.f32 %v1084, %v1092
    %v1095 = vtanh.pop %v1094
    %1097 = vrot.lane.b32.xlu0 %v1095, 64
    %v1098 = vpop.permute.xlu0 %1097
    %v1100 = vmul.f32 %v1082, %v1098
    %1102 = vrot.lane.b32.xlu0 %v1100, 32
    %v1103 = vpop.permute.xlu0 %1102
    %1105 = vst.msk [vmem:[#allocation2 + $0x28] sm:$0xff] %vm488, %v1103
    %v1106 = vsel %vm488, %v1103, 0
    %1108 = vmatprep.subr.mxu0 0.0
    %1109 = vmatpush1.msra.mxu0 %v481
    %1110 = vmatprep.subr.mxu0 0.0
    %1111 = vmatpush1.msra.mxu0 %v482
    %1112 = vmatprep.subr.mxu0 0.0
    %1113 = vmatpush1.msra.mxu0 %v483
    %1114 = vmatprep.subr.mxu0 0.0
    %1115 = vmatpush1.msra.mxu0 %v484
    %1116 = vmatprep.subr.mxu0 0.0
    %1117 = vmatpush1.msra.mxu0 0.0
    %1118 = vmatprep.subr.mxu0 0.0
    %1119 = vmatpush1.msra.mxu0 0.0
    %1120 = vmatprep.subr.mxu0 0.0
    %1121 = vmatpush1.msra.mxu0 0.0
    %1122 = vmatprep.subr.mxu0 0.0
    %1123 = vmatpush1.msra.mxu0 0.0
    %1124 = vmatprep.subr.mxu0 0.0
    %1125 = vmatpush1.msra.mxu0 0.0
    %1126 = vmatprep.subr.mxu0 0.0
    %1127 = vmatpush1.msra.mxu0 0.0
    %1128 = vmatprep.subr.mxu0 0.0
    %1129 = vmatpush1.msra.mxu0 0.0
    %1130 = vmatprep.subr.mxu0 0.0
    %1131 = vmatpush1.msra.mxu0 0.0
    %1132 = vmatprep.subr.mxu0 0.0
    %1133 = vmatpush1.msra.mxu0 0.0
    %1134 = vmatprep.subr.mxu0 0.0
    %1135 = vmatpush1.msra.mxu0 0.0
    %1136 = vmatprep.subr.mxu0 0.0
    %1137 = vmatpush1.msra.mxu0 0.0
    %1138 = vmatprep.subr.mxu0 0.0
    %1139 = vmatpush1.msra.mxu0 0.0
    %1140 = vmatprep.subr.mxu0 0.0
    %1141 = vmatpush1.msra.mxu0 0.0
    %1142 = vmatprep.subr.mxu0 0.0
    %1143 = vmatpush1.msra.mxu0 0.0
    %1144 = vmatprep.subr.mxu0 0.0
    %1145 = vmatpush1.msra.mxu0 0.0
    %1146 = vmatprep.subr.mxu0 0.0
    %1147 = vmatpush1.msra.mxu0 0.0
    %1148 = vmatprep.subr.mxu0 0.0
    %1149 = vmatpush1.msra.mxu0 0.0
    %1150 = vmatprep.subr.mxu0 0.0
    %1151 = vmatpush1.msra.mxu0 0.0
    %1152 = vmatprep.subr.mxu0 0.0
    %1153 = vmatpush1.msra.mxu0 0.0
    %1154 = vmatprep.subr.mxu0 0.0
    %1155 = vmatpush1.msra.mxu0 0.0
    %1156 = vmatprep.subr.mxu0 0.0
    %1157 = vmatpush1.msra.mxu0 0.0
    %1158 = vmatprep.subr.mxu0 0.0
    %1159 = vmatpush1.msra.mxu0 0.0
    %1160 = vmatprep.subr.mxu0 0.0
    %1161 = vmatpush1.msra.mxu0 0.0
    %1162 = vmatprep.subr.mxu0 0.0
    %1163 = vmatpush1.msra.mxu0 0.0
    %1164 = vmatprep.subr.mxu0 0.0
    %1165 = vmatpush1.msra.mxu0 0.0
    %1166 = vmatprep.subr.mxu0 0.0
    %1167 = vmatpush1.msra.mxu0 0.0
    %1168 = vmatprep.subr.mxu0 0.0
    %1169 = vmatpush1.msra.mxu0 0.0
    %1170 = vmatprep.subr.mxu0 0.0
    %1171 = vmatpush1.msra.mxu0 0.0
    %1172 = vmatprep.mubr.f32.mxu0 0.0
    %1173 = vmatmul.mubr.f32.gmra.mrb[0].mxu0 %v1106
    %v1174 = vpop.f32.mrb[0].mxu0
    %v1175 = vadd.f32 0.0, %v1174
    %v1176 = vpop.f32.mrb[0].mxu0
    %1177 = vdwg.mxu0
    %v1178 = vadd.f32 %v479, %v1175
    %v1179 = vxor.u32 %v1178, 2147483648
    %v1180 = vmul.f32 %v1179, 1.442695
    %v1181 = vpow.pop %v1180
    %v1182 = vadd.f32 %v1181, 1.0
    %v1183 = vrcp.pop %v1182
    %v1184 = vmul.f32 1.0, %v1183
    %v1185 = vtanh.pop %v1178
    %v1186 = vmul.f32 %v1184, %v1094
    %1188 = vrot.lane.b32.xlu0 %v1185, 64
    %v1189 = vpop.permute.xlu0 %1188
    %v1191 = vmul.f32 %v1184, %v1189
    %1193 = vrot.lane.b32.xlu0 %v1191, 32
    %v1194 = vpop.permute.xlu0 %1193
    %v1196 = vadd.f32 %v1186, %v1194
    %v1197 = vtanh.pop %v1196
    %1199 = vrot.lane.b32.xlu0 %v1197, 64
    %v1200 = vpop.permute.xlu0 %1199
    %v1202 = vmul.f32 %v1184, %v1200
    %1204 = vrot.lane.b32.xlu0 %v1202, 32
    %v1205 = vpop.permute.xlu0 %1204
    %1207 = vst.msk [vmem:[#allocation2 + $0x30] sm:$0xff] %vm488, %v1205
    %v1208 = vsel %vm488, %v1205, 0
    %1210 = vmatprep.subr.mxu0 0.0
    %1211 = vmatpush1.msra.mxu0 %v481
    %1212 = vmatprep.subr.mxu0 0.0
    %1213 = vmatpush1.msra.mxu0 %v482
    %1214 = vmatprep.subr.mxu0 0.0
    %1215 = vmatpush1.msra.mxu0 %v483
    %1216 = vmatprep.subr.mxu0 0.0
    %1217 = vmatpush1.msra.mxu0 %v484
    %1218 = vmatprep.subr.mxu0 0.0
    %1219 = vmatpush1.msra.mxu0 0.0
    %1220 = vmatprep.subr.mxu0 0.0
    %1221 = vmatpush1.msra.mxu0 0.0
    %1222 = vmatprep.subr.mxu0 0.0
    %1223 = vmatpush1.msra.mxu0 0.0
    %1224 = vmatprep.subr.mxu0 0.0
    %1225 = vmatpush1.msra.mxu0 0.0
    %1226 = vmatprep.subr.mxu0 0.0
    %1227 = vmatpush1.msra.mxu0 0.0
    %1228 = vmatprep.subr.mxu0 0.0
    %1229 = vmatpush1.msra.mxu0 0.0
    %1230 = vmatprep.subr.mxu0 0.0
    %1231 = vmatpush1.msra.mxu0 0.0
    %1232 = vmatprep.subr.mxu0 0.0
    %1233 = vmatpush1.msra.mxu0 0.0
    %1234 = vmatprep.subr.mxu0 0.0
    %1235 = vmatpush1.msra.mxu0 0.0
    %1236 = vmatprep.subr.mxu0 0.0
    %1237 = vmatpush1.msra.mxu0 0.0
    %1238 = vmatprep.subr.mxu0 0.0
    %1239 = vmatpush1.msra.mxu0 0.0
    %1240 = vmatprep.subr.mxu0 0.0
    %1241 = vmatpush1.msra.mxu0 0.0
    %1242 = vmatprep.subr.mxu0 0.0
    %1243 = vmatpush1.msra.mxu0 0.0
    %1244 = vmatprep.subr.mxu0 0.0
    %1245 = vmatpush1.msra.mxu0 0.0
    %1246 = vmatprep.subr.mxu0 0.0
    %1247 = vmatpush1.msra.mxu0 0.0
    %1248 = vmatprep.subr.mxu0 0.0
    %1249 = vmatpush1.msra.mxu0 0.0
    %1250 = vmatprep.subr.mxu0 0.0
    %1251 = vmatpush1.msra.mxu0 0.0
    %1252 = vmatprep.subr.mxu0 0.0
    %1253 = vmatpush1.msra.mxu0 0.0
    %1254 = vmatprep.subr.mxu0 0.0
    %1255 = vmatpush1.msra.mxu0 0.0
    %1256 = vmatprep.subr.mxu0 0.0
    %1257 = vmatpush1.msra.mxu0 0.0
    %1258 = vmatprep.subr.mxu0 0.0
    %1259 = vmatpush1.msra.mxu0 0.0
    %1260 = vmatprep.subr.mxu0 0.0
    %1261 = vmatpush1.msra.mxu0 0.0
    %1262 = vmatprep.subr.mxu0 0.0
    %1263 = vmatpush1.msra.mxu0 0.0
    %1264 = vmatprep.subr.mxu0 0.0
    %1265 = vmatpush1.msra.mxu0 0.0
    %1266 = vmatprep.subr.mxu0 0.0
    %1267 = vmatpush1.msra.mxu0 0.0
    %1268 = vmatprep.subr.mxu0 0.0
    %1269 = vmatpush1.msra.mxu0 0.0
    %1270 = vmatprep.subr.mxu0 0.0
    %1271 = vmatpush1.msra.mxu0 0.0
    %1272 = vmatprep.subr.mxu0 0.0
    %1273 = vmatpush1.msra.mxu0 0.0
    %1274 = vmatprep.mubr.f32.mxu0 0.0
    %1275 = vmatmul.mubr.f32.gmra.mrb[0].mxu0 %v1208
    %v1276 = vpop.f32.mrb[0].mxu0
    %v1277 = vadd.f32 0.0, %v1276
    %v1278 = vpop.f32.mrb[0].mxu0
    %1279 = vdwg.mxu0
    %v1280 = vadd.f32 %v480, %v1277
    %v1281 = vxor.u32 %v1280, 2147483648
    %v1282 = vmul.f32 %v1281, 1.442695
    %v1283 = vpow.pop %v1282
    %v1284 = vadd.f32 %v1283, 1.0
    %v1285 = vrcp.pop %v1284
    %v1286 = vmul.f32 1.0, %v1285
    %v1287 = vtanh.pop %v1280
    %v1288 = vmul.f32 %v1286, %v1196
    %1290 = vrot.lane.b32.xlu0 %v1287, 64
    %v1291 = vpop.permute.xlu0 %1290
    %v1293 = vmul.f32 %v1286, %v1291
    %1295 = vrot.lane.b32.xlu0 %v1293, 32
    %v1296 = vpop.permute.xlu0 %1295
    %v1298 = vadd.f32 %v1288, %v1296
    %v1299 = vtanh.pop %v1298
    %1301 = vrot.lane.b32.xlu0 %v1299, 64
    %v1302 = vpop.permute.xlu0 %1301
    %v1304 = vmul.f32 %v1286, %v1302
    %1306 = vrot.lane.b32.xlu0 %v1304, 32
    %v1307 = vpop.permute.xlu0 %1306
    %1309 = vst.msk [vmem:[#allocation2 + $0x38] sm:$0xff] %vm488, %v1307
    %v1310 = vld [vmem:[#allocation2] sm:$0xff]
    %v1311 = vld [vmem:[#allocation2 + $0x8] sm:$0xff]
    %v1312 = vld [vmem:[#allocation2 + $0x10] sm:$0xff]
    %v1313 = vld [vmem:[#allocation2 + $0x18] sm:$0xff]
    %v1314 = vld [vmem:[#allocation2 + $0x20] sm:$0xff]
    %v1315 = vld [vmem:[#allocation2 + $0x28] sm:$0xff]
    %v1316 = vld [vmem:[#allocation2 + $0x30] sm:$0xff]
    %v1317 = vld [vmem:[#allocation2 + $0x38] sm:$0xff]
    %v1318 = vld [vmem:[%s9] sm:$0xff]
    %v1319 = vld [vmem:[%s9 + $0x8] sm:$0xff]
    %v1320 = vld [vmem:[%s9 + $0x10] sm:$0xff]
    %v1321 = vld [vmem:[%s9 + $0x18] sm:$0xff]
    %v1322 = vld [vmem:[%s10] sm:$0x1]
    %v1324 = vlaneseq
    %v1325 = vshrl.u32 %v1324, 7
    %v1326 = vsub.s32 0, %v1325
    %v1327 = vrot.slane %v1322, %v1326
    %v1330 = vsel %vm488, %v1310, 0
    %v1333 = vsel %vm488, %v1311, 0
    %v1336 = vsel %vm488, %v1312, 0
    %v1339 = vsel %vm488, %v1313, 0
    %v1342 = vsel %vm488, %v1314, 0
    %v1345 = vsel %vm488, %v1315, 0
    %v1348 = vsel %vm488, %v1316, 0
    %v1351 = vsel %vm488, %v1317, 0
    %1353 = vmatprep.subr.mxu0 0.0
    %1354 = vmatpush1.msra.mxu0 %v1318
    %1355 = vmatprep.subr.mxu0 0.0
    %1356 = vmatpush1.msra.mxu0 %v1319
    %1357 = vmatprep.subr.mxu0 0.0
    %1358 = vmatpush1.msra.mxu0 %v1320
    %1359 = vmatprep.subr.mxu0 0.0
    %1360 = vmatpush1.msra.mxu0 %v1321
    %1361 = vmatprep.subr.mxu0 0.0
    %1362 = vmatpush1.msra.mxu0 0.0
    %1363 = vmatprep.subr.mxu0 0.0
    %1364 = vmatpush1.msra.mxu0 0.0
    %1365 = vmatprep.subr.mxu0 0.0
    %1366 = vmatpush1.msra.mxu0 0.0
    %1367 = vmatprep.subr.mxu0 0.0
    %1368 = vmatpush1.msra.mxu0 0.0
    %1369 = vmatprep.subr.mxu0 0.0
    %1370 = vmatpush1.msra.mxu0 0.0
    %1371 = vmatprep.subr.mxu0 0.0
    %1372 = vmatpush1.msra.mxu0 0.0
    %1373 = vmatprep.subr.mxu0 0.0
    %1374 = vmatpush1.msra.mxu0 0.0
    %1375 = vmatprep.subr.mxu0 0.0
    %1376 = vmatpush1.msra.mxu0 0.0
    %1377 = vmatprep.subr.mxu0 0.0
    %1378 = vmatpush1.msra.mxu0 0.0
    %1379 = vmatprep.subr.mxu0 0.0
    %1380 = vmatpush1.msra.mxu0 0.0
    %1381 = vmatprep.subr.mxu0 0.0
    %1382 = vmatpush1.msra.mxu0 0.0
    %1383 = vmatprep.subr.mxu0 0.0
    %1384 = vmatpush1.msra.mxu0 0.0
    %1385 = vmatprep.subr.mxu0 0.0
    %1386 = vmatpush1.msra.mxu0 0.0
    %1387 = vmatprep.subr.mxu0 0.0
    %1388 = vmatpush1.msra.mxu0 0.0
    %1389 = vmatprep.subr.mxu0 0.0
    %1390 = vmatpush1.msra.mxu0 0.0
    %1391 = vmatprep.subr.mxu0 0.0
    %1392 = vmatpush1.msra.mxu0 0.0
    %1393 = vmatprep.subr.mxu0 0.0
    %1394 = vmatpush1.msra.mxu0 0.0
    %1395 = vmatprep.subr.mxu0 0.0
    %1396 = vmatpush1.msra.mxu0 0.0
    %1397 = vmatprep.subr.mxu0 0.0
    %1398 = vmatpush1.msra.mxu0 0.0
    %1399 = vmatprep.subr.mxu0 0.0
    %1400 = vmatpush1.msra.mxu0 0.0
    %1401 = vmatprep.subr.mxu0 0.0
    %1402 = vmatpush1.msra.mxu0 0.0
    %1403 = vmatprep.subr.mxu0 0.0
    %1404 = vmatpush1.msra.mxu0 0.0
    %1405 = vmatprep.subr.mxu0 0.0
    %1406 = vmatpush1.msra.mxu0 0.0
    %1407 = vmatprep.subr.mxu0 0.0
    %1408 = vmatpush1.msra.mxu0 0.0
    %1409 = vmatprep.subr.mxu0 0.0
    %1410 = vmatpush1.msra.mxu0 0.0
    %1411 = vmatprep.subr.mxu0 0.0
    %1412 = vmatpush1.msra.mxu0 0.0
    %1413 = vmatprep.subr.mxu0 0.0
    %1414 = vmatpush1.msra.mxu0 0.0
    %1415 = vmatprep.subr.mxu0 0.0
    %1416 = vmatpush1.msra.mxu0 0.0
    %1417 = vmatprep.mubr.f32.mxu0 0.0
    %1418 = vmatmul.mubr.f32.gmra.mrb[0].mxu0 %v1330
    %v1419 = vpop.f32.mrb[0].mxu0
    %v1420 = vadd.f32 %v1327, %v1419
    %v1421 = vpop.f32.mrb[0].mxu0
    %1422 = vmatprep.mubr.f32.mxu0 0.0
    %1423 = vmatmul.mubr.f32.gmra.mrb[0].mxu0 %v1333
    %v1424 = vpop.f32.mrb[0].mxu0
    %v1425 = vadd.f32 %v1327, %v1424
    %v1426 = vpop.f32.mrb[0].mxu0
    %1427 = vmatprep.mubr.f32.mxu0 0.0
    %1428 = vmatmul.mubr.f32.gmra.mrb[0].mxu0 %v1336
    %v1429 = vpop.f32.mrb[0].mxu0
    %v1430 = vadd.f32 %v1327, %v1429
    %v1431 = vpop.f32.mrb[0].mxu0
    %1432 = vmatprep.mubr.f32.mxu0 0.0
    %1433 = vmatmul.mubr.f32.gmra.mrb[0].mxu0 %v1339
    %v1434 = vpop.f32.mrb[0].mxu0
    %v1435 = vadd.f32 %v1327, %v1434
    %v1436 = vpop.f32.mrb[0].mxu0
    %1437 = vmatprep.mubr.f32.mxu0 0.0
    %1438 = vmatmul.mubr.f32.gmra.mrb[0].mxu0 %v1342
    %v1439 = vpop.f32.mrb[0].mxu0
    %v1440 = vadd.f32 %v1327, %v1439
    %v1441 = vpop.f32.mrb[0].mxu0
    %1442 = vmatprep.mubr.f32.mxu0 0.0
    %1443 = vmatmul.mubr.f32.gmra.mrb[0].mxu0 %v1345
    %v1444 = vpop.f32.mrb[0].mxu0
    %v1445 = vadd.f32 %v1327, %v1444
    %v1446 = vpop.f32.mrb[0].mxu0
    %1447 = vmatprep.mubr.f32.mxu0 0.0
    %1448 = vmatmul.mubr.f32.gmra.mrb[0].mxu0 %v1348
    %v1449 = vpop.f32.mrb[0].mxu0
    %v1450 = vadd.f32 %v1327, %v1449
    %v1451 = vpop.f32.mrb[0].mxu0
    %1452 = vmatprep.mubr.f32.mxu0 0.0
    %1453 = vmatmul.mubr.f32.gmra.mrb[0].mxu0 %v1351
    %v1454 = vpop.f32.mrb[0].mxu0
    %v1455 = vadd.f32 %v1327, %v1454
    %v1456 = vpop.f32.mrb[0].mxu0
    %1457 = vdwg.mxu0
    %vm1458 = vcmask 72712
    %v1459 = vsel %vm1458, %v1420, -inf
    %1460 = vmax.xlane.f32.xlu0 %v1459
    %v1461 = vpop.xlane.xlu0 %1460
    %v1462 = vsel %vm1458, %v1425, -inf
    %1463 = vmax.xlane.f32.xlu0 %v1462
    %v1464 = vpop.xlane.xlu0 %1463
    %v1465 = vsel %vm1458, %v1430, -inf
    %1466 = vmax.xlane.f32.xlu0 %v1465
    %v1467 = vpop.xlane.xlu0 %1466
    %v1468 = vsel %vm1458, %v1435, -inf
    %1469 = vmax.xlane.f32.xlu0 %v1468
    %v1470 = vpop.xlane.xlu0 %1469
    %v1471 = vsel %vm1458, %v1440, -inf
    %1472 = vmax.xlane.f32.xlu0 %v1471
    %v1473 = vpop.xlane.xlu0 %1472
    %v1474 = vsel %vm1458, %v1445, -inf
    %1475 = vmax.xlane.f32.xlu0 %v1474
    %v1476 = vpop.xlane.xlu0 %1475
    %v1477 = vsel %vm1458, %v1450, -inf
    %1478 = vmax.xlane.f32.xlu0 %v1477
    %v1479 = vpop.xlane.xlu0 %1478
    %v1480 = vsel %vm1458, %v1455, -inf
    %1481 = vmax.xlane.f32.xlu0 %v1480
    %v1482 = vpop.xlane.xlu0 %1481
    %v1483 = vsub.f32 %v1420, %v1461
    %v1484 = vsub.f32 %v1425, %v1464
    %v1485 = vsub.f32 %v1430, %v1467
    %v1486 = vsub.f32 %v1435, %v1470
    %v1487 = vsub.f32 %v1440, %v1473
    %v1488 = vsub.f32 %v1445, %v1476
    %v1489 = vsub.f32 %v1450, %v1479
    %v1490 = vsub.f32 %v1455, %v1482
    %v1491 = vmul.f32 %v1483, 1.442695
    %v1492 = vpow.pop %v1491
    %v1493 = vmul.f32 %v1484, 1.442695
    %v1494 = vpow.pop %v1493
    %v1495 = vmul.f32 %v1485, 1.442695
    %v1496 = vpow.pop %v1495
    %v1497 = vmul.f32 %v1486, 1.442695
    %v1498 = vpow.pop %v1497
    %v1499 = vmul.f32 %v1487, 1.442695
    %v1500 = vpow.pop %v1499
    %v1501 = vmul.f32 %v1488, 1.442695
    %v1502 = vpow.pop %v1501
    %v1503 = vmul.f32 %v1489, 1.442695
    %v1504 = vpow.pop %v1503
    %v1505 = vmul.f32 %v1490, 1.442695
    %v1506 = vpow.pop %v1505
    %1515 = vrot.lane.b32.xlu0 %v1492, 127
    %v1516 = vpop.permute.xlu0 %1515
    %1517 = vrot.lane.b32.xlu0 %v1494, 127
    %v1518 = vpop.permute.xlu0 %1517
    %1519 = vrot.lane.b32.xlu0 %v1496, 127
    %v1520 = vpop.permute.xlu0 %1519
    %1521 = vrot.lane.b32.xlu0 %v1498, 127
    %v1522 = vpop.permute.xlu0 %1521
    %1523 = vrot.lane.b32.xlu0 %v1500, 127
    %v1524 = vpop.permute.xlu0 %1523
    %1525 = vrot.lane.b32.xlu0 %v1502, 127
    %v1526 = vpop.permute.xlu0 %1525
    %1527 = vrot.lane.b32.xlu0 %v1504, 127
    %v1528 = vpop.permute.xlu0 %1527
    %1529 = vrot.lane.b32.xlu0 %v1506, 127
    %v1530 = vpop.permute.xlu0 %1529
    %v1539 = vsel %vm65, %v1516, 0.0
    %1540 = vadd.xlane.f32.xlu0 %v1539
    %v1541 = vpop.xlane.xlu0 %1540
    %v1542 = vsel %vm65, %v1518, 0.0
    %1543 = vadd.xlane.f32.xlu0 %v1542
    %v1544 = vpop.xlane.xlu0 %1543
    %v1545 = vsel %vm65, %v1520, 0.0
    %1546 = vadd.xlane.f32.xlu0 %v1545
    %v1547 = vpop.xlane.xlu0 %1546
    %v1548 = vsel %vm65, %v1522, 0.0
    %1549 = vadd.xlane.f32.xlu0 %v1548
    %v1550 = vpop.xlane.xlu0 %1549
    %v1551 = vsel %vm65, %v1524, 0.0
    %1552 = vadd.xlane.f32.xlu0 %v1551
    %v1553 = vpop.xlane.xlu0 %1552
    %v1554 = vsel %vm65, %v1526, 0.0
    %1555 = vadd.xlane.f32.xlu0 %v1554
    %v1556 = vpop.xlane.xlu0 %1555
    %v1557 = vsel %vm65, %v1528, 0.0
    %1558 = vadd.xlane.f32.xlu0 %v1557
    %v1559 = vpop.xlane.xlu0 %1558
    %v1560 = vsel %vm65, %v1530, 0.0
    %1561 = vadd.xlane.f32.xlu0 %v1560
    %v1562 = vpop.xlane.xlu0 %1561
    %v1563 = vlog2.pop %v1541
    %v1564 = vmul.f32 %v1563, 0.6931472
    %v1565 = vlog2.pop %v1544
    %v1566 = vmul.f32 %v1565, 0.6931472
    %v1567 = vlog2.pop %v1547
    %v1568 = vmul.f32 %v1567, 0.6931472
    %v1569 = vlog2.pop %v1550
    %v1570 = vmul.f32 %v1569, 0.6931472
    %v1571 = vlog2.pop %v1553
    %v1572 = vmul.f32 %v1571, 0.6931472
    %v1573 = vlog2.pop %v1556
    %v1574 = vmul.f32 %v1573, 0.6931472
    %v1575 = vlog2.pop %v1559
    %v1576 = vmul.f32 %v1575, 0.6931472
    %v1577 = vlog2.pop %v1562
    %v1578 = vmul.f32 %v1577, 0.6931472
    %v1579 = vadd.f32 %v1461, %v1564
    %v1580 = vadd.f32 %v1464, %v1566
    %v1581 = vadd.f32 %v1467, %v1568
    %v1582 = vadd.f32 %v1470, %v1570
    %v1583 = vadd.f32 %v1473, %v1572
    %v1584 = vadd.f32 %v1476, %v1574
    %v1585 = vadd.f32 %v1479, %v1576
    %v1586 = vadd.f32 %v1482, %v1578
    %v1587 = vxor.u32 %v1420, 2147483648
    %v1588 = vxor.u32 %v1425, 2147483648
    %v1589 = vxor.u32 %v1430, 2147483648
    %v1590 = vxor.u32 %v1435, 2147483648
    %v1591 = vxor.u32 %v1440, 2147483648
    %v1592 = vxor.u32 %v1445, 2147483648
    %v1593 = vxor.u32 %v1450, 2147483648
    %v1594 = vxor.u32 %v1455, 2147483648
    %v1595 = vmul.f32 %v1587, 1.442695
    %v1596 = vpow.pop %v1595
    %v1597 = vmul.f32 %v1588, 1.442695
    %v1598 = vpow.pop %v1597
    %v1599 = vmul.f32 %v1589, 1.442695
    %v1600 = vpow.pop %v1599
    %v1601 = vmul.f32 %v1590, 1.442695
    %v1602 = vpow.pop %v1601
    %v1603 = vmul.f32 %v1591, 1.442695
    %v1604 = vpow.pop %v1603
    %v1605 = vmul.f32 %v1592, 1.442695
    %v1606 = vpow.pop %v1605
    %v1607 = vmul.f32 %v1593, 1.442695
    %v1608 = vpow.pop %v1607
    %v1609 = vmul.f32 %v1594, 1.442695
    %v1610 = vpow.pop %v1609
    %v1611 = vadd.f32 %v1596, 1.0
    %v1612 = vadd.f32 %v1598, 1.0
    %v1613 = vadd.f32 %v1600, 1.0
    %v1614 = vadd.f32 %v1602, 1.0
    %v1615 = vadd.f32 %v1604, 1.0
    %v1616 = vadd.f32 %v1606, 1.0
    %v1617 = vadd.f32 %v1608, 1.0
    %v1618 = vadd.f32 %v1610, 1.0
    %v1619 = vrcp.pop %v1611
    %v1620 = vmul.f32 1.0, %v1619
    %v1621 = vrcp.pop %v1612
    %v1622 = vmul.f32 1.0, %v1621
    %v1623 = vrcp.pop %v1613
    %v1624 = vmul.f32 1.0, %v1623
    %v1625 = vrcp.pop %v1614
    %v1626 = vmul.f32 1.0, %v1625
    %v1627 = vrcp.pop %v1615
    %v1628 = vmul.f32 1.0, %v1627
    %v1629 = vrcp.pop %v1616
    %v1630 = vmul.f32 1.0, %v1629
    %v1631 = vrcp.pop %v1617
    %v1632 = vmul.f32 1.0, %v1631
    %v1633 = vrcp.pop %v1618
    %v1634 = vmul.f32 1.0, %v1633
    %vm1635 = vcmask 7168
    %1636 = vst.msk [vmem:[%s11] sm:$0xff] %vm1635, %v1620
    %1637 = vst.msk [vmem:[%s11 + $0x8] sm:$0xff] %vm1635, %v1622
    %1638 = vst.msk [vmem:[%s11 + $0x10] sm:$0xff] %vm1635, %v1624
    %1639 = vst.msk [vmem:[%s11 + $0x18] sm:$0xff] %vm1635, %v1626
    %1640 = vst.msk [vmem:[%s11 + $0x20] sm:$0xff] %vm1635, %v1628
    %1641 = vst.msk [vmem:[%s11 + $0x28] sm:$0xff] %vm1635, %v1630
    %1642 = vst.msk [vmem:[%s11 + $0x30] sm:$0xff] %vm1635, %v1632
    %1643 = vst.msk [vmem:[%s11 + $0x38] sm:$0xff] %vm1635, %v1634
    %v1644 = vsub.f32 %v1420, %v1579
    %v1645 = vsub.f32 %v1425, %v1580
    %v1646 = vsub.f32 %v1430, %v1581
    %v1647 = vsub.f32 %v1435, %v1582
    %v1648 = vsub.f32 %v1440, %v1583
    %v1649 = vsub.f32 %v1445, %v1584
    %v1650 = vsub.f32 %v1450, %v1585
    %v1651 = vsub.f32 %v1455, %v1586
    %1652 = vst.msk [vmem:[%s11] sm:$0xff] %vm1458, %v1644
    %1653 = vst.msk [vmem:[%s11 + $0x8] sm:$0xff] %vm1458, %v1645
    %1654 = vst.msk [vmem:[%s11 + $0x10] sm:$0xff] %vm1458, %v1646
    %1655 = vst.msk [vmem:[%s11 + $0x18] sm:$0xff] %vm1458, %v1647
    %1656 = vst.msk [vmem:[%s11 + $0x20] sm:$0xff] %vm1458, %v1648
    %1657 = vst.msk [vmem:[%s11 + $0x28] sm:$0xff] %vm1458, %v1649
    %1658 = vst.msk [vmem:[%s11 + $0x30] sm:$0xff] %vm1458, %v1650
    %1659 = vst.msk [vmem:[%s11 + $0x38] sm:$0xff] %vm1458, %v1651
    %vm1660 = vcmask 138312
    %1661 = vst.msk [vmem:[%s11] sm:$0xff] %vm1660, %v1420
    %1662 = vst.msk [vmem:[%s11 + $0x8] sm:$0xff] %vm1660, %v1425
    %1663 = vst.msk [vmem:[%s11 + $0x10] sm:$0xff] %vm1660, %v1430
    %1664 = vst.msk [vmem:[%s11 + $0x18] sm:$0xff] %vm1660, %v1435
    %1665 = vst.msk [vmem:[%s11 + $0x20] sm:$0xff] %vm1660, %v1440
    %1666 = vst.msk [vmem:[%s11 + $0x28] sm:$0xff] %vm1660, %v1445
    %1667 = vst.msk [vmem:[%s11 + $0x30] sm:$0xff] %vm1660, %v1450
    %1668 = vst.msk [vmem:[%s11 + $0x38] sm:$0xff] %vm1660, %v1455
    %1669 = vst.msk [vmem:[#allocation3] sm:$0xff] %vm488, %v1307
    %1671 = vrot.lane.b32.xlu0 %v1298, 96
    %v1672 = vpop.permute.xlu0 %1671
    %s1674 = scalar_lea.vmem [#allocation3], 8
    %1675 = vst.msk [vmem:[%s1674] sm:$0xff] %vm488, %v1672
    // Predicated region
    $region46: #{tpu_custom_call.1} parent=1 // pred_check
      _
    $region47: #{tpu_custom_call.1} parent=1 // pred_check_branch
      %1677 = sbr.rel (0) target = $region49
    $region48: #{tpu_custom_call.1} parent=1 // pred_region
      _
    $region49: #{tpu_custom_call.1} parent=1 // pred_fallthru
      _
    // Predicated region
    $region50: #{tpu_custom_call.1} parent=1 // pred_check
      _
    $region51: #{tpu_custom_call.1} parent=1 // pred_check_branch
      %1679 = sbr.rel (0) target = $region53
    $region52: #{tpu_custom_call.1} parent=1 // pred_region
      %s1681 = ssub.s32 256, 256
      %1682 = vsyncadd [#allocation4], %s1681
      %s1683 = sshll.u32 [#allocation3], 4
      %s1684 = int_to_ptr.vmem [resolvable:$true] %s1683
      %1689 = dma.vmem_to_hbm [thread:$0]  %s1684, 256, %s12, [#allocation4], 128, 128, 8
    $region53: #{tpu_custom_call.1} parent=1 // pred_fallthru
      _
    // Predicated region
    $region54: #{tpu_custom_call.1} parent=1 // pred_check
      _
    $region55: #{tpu_custom_call.1} parent=1 // pred_check_branch
      %1691 = sbr.rel (0) target = $region57
    $region56: #{tpu_custom_call.1} parent=1 // pred_region
      _
    $region57: #{tpu_custom_call.1} parent=1 // pred_fallthru
      _
    // Predicated region
    $region58: #{tpu_custom_call.1} parent=1 // pred_check
      _
    $region59: #{tpu_custom_call.1} parent=1 // pred_check_branch
      %1693 = sbr.rel (0) target = $region61
    $region60: #{tpu_custom_call.1} parent=1 // pred_region
      %1694 = dma.done [#allocation4], 256
    $region61: #{tpu_custom_call.1} parent=1 // pred_fallthru
      _
    %1695 = vsyncpa [#allocation4], 1

</llo_original>
